<compile_context>
chip_gen: v7x
topology: tpu7x:2x2x1
jax: 0.10.0
libtpu: 0.0.40
codegen_flags: <defaults>
</compile_context>

<pallas_src>
import math
import numpy as np
import jax
import jax.numpy as jnp
from jax.experimental import pallas as pl
from jax.experimental.pallas import tpu as pltpu


def _round_up(x, m):
    return (x + m - 1) // m * m


def _build_fused_kernel(v_num, h_pad, o_pad, compute_dtype):
    """One kernel computing all v_num heads for a (bn, .) batch tile."""

    def kernel(xa_ref, w1_ref, b1_ref, w2_ref, b2_ref, w3_ref, b3_ref, o_ref):
        xa = xa_ref[...]                                   # (bn, d_tot) compute_dtype
        # Layer 1, all heads fused: one lane-dense (bn, d_tot) @ (d_tot, v*h_pad).
        z1 = (jnp.dot(xa, w1_ref[...], preferred_element_type=jnp.float32)
              + b1_ref[...])                               # (bn, v*h_pad) f32
        h1 = jnp.maximum(z1, 0.1 * z1).astype(compute_dtype)   # LeakyReLU(0.1)
        for v in range(v_num):                             # static unroll; tiny v_num
            h1v = h1[:, v * h_pad:(v + 1) * h_pad]         # 128-aligned static slice
            # Layer 2
            z2 = jnp.dot(h1v, w2_ref[v], preferred_element_type=jnp.float32) + b2_ref[v]
            h2 = jnp.maximum(z2, 0.1 * z2).astype(compute_dtype)
            # Layer 3 (logits), lane-dense (o_pad = multiple of 128) store
            y = jnp.dot(h2, w3_ref[v], preferred_element_type=jnp.float32) + b3_ref[v]
            o_ref[:, v * o_pad:(v + 1) * o_pad] = y.astype(o_ref.dtype)

    return kernel


def _const_spec(arr, single_buffer):
    """Weight spec: constant block index across the batch grid (VMEM-resident)."""
    idx_map = lambda i, _nd=arr.ndim: (0,) * _nd
    if single_buffer and hasattr(pl, "Buffered"):
        try:
            # Constant index_map -> no need to double-buffer; frees VMEM headroom.
            return pl.BlockSpec(arr.shape, idx_map, pipeline_mode=pl.Buffered(1))
        except TypeError:
            pass
    return pl.BlockSpec(arr.shape, idx_map)


def make_params(key, in_size_list, aux_size_list):
    """Stacked parameters for one 3-layer MLP per entry of in_size_list (f32 masters)."""
    v_num = len(in_size_list)
    i_dim = int(np.sum(in_size_list) + (np.sum(aux_size_list) if len(aux_size_list) else 0))
    h_dim = 4 * i_dim
    o_max = int(max(in_size_list))
    gain = math.sqrt(2.0)
    # Deterministic stand-in for nn.init.orthogonal_(gain=sqrt(2)); weights stored (in, out).
    ortho = jax.nn.initializers.orthogonal(scale=gain)
    w1, w2, w3 = [], [], []
    for o_dim in in_size_list:
        k1, k2, k3, key = jax.random.split(key, 4)
        w1.append(ortho(k1, (i_dim, h_dim), jnp.float32))                    # (Dtot, H)
        w2.append(ortho(k2, (h_dim, h_dim), jnp.float32))                    # (H, H)
        w3.append(jnp.pad(ortho(k3, (h_dim, o_dim), jnp.float32),
                          ((0, 0), (0, o_max - o_dim))))                     # (H, o_max)
    return dict(
        w1=jnp.stack(w1),                                                    # (v, Dtot, H)
        b1=jnp.zeros((v_num, 1, h_dim), jnp.float32),
        w2=jnp.stack(w2),                                                    # (v, H, H)
        b2=jnp.zeros((v_num, 1, h_dim), jnp.float32),
        w3=jnp.stack(w3),                                                    # (v, H, o_max)
        b3=jnp.zeros((v_num, 1, o_max), jnp.float32),
    )


def functional_net_forward(inputs, masks, aux_inputs, params, in_size_list,
                           *, block_n=2048, compute_dtype=jnp.bfloat16):
    """inputs: (N, sum(in_size_list)); masks: (v_num, v_num) 0/1;
    aux_inputs: (N, sum(aux_size_list)) or None. Returns list of (N, in_size_list[i]) f32.

    NOTE: default compute_dtype=bfloat16 uses bf16 matmul operands / bf16 HBM output
    (f32 accumulation); pass compute_dtype=float32 for exact PyTorch-f32 parity."""
    in_size_list = [int(s) for s in in_size_list]
    v_num = len(in_size_list)
    compute_dtype = jnp.dtype(compute_dtype)
    out_dtype = (jnp.dtype(jnp.float32) if compute_dtype == jnp.dtype(jnp.float32)
                 else compute_dtype)

    N = inputs.shape[0]
    d_in = int(np.sum(in_size_list))
    if aux_inputs is None:
        aux_inputs = jnp.zeros((N, 0), inputs.dtype)
    d_aux = int(aux_inputs.shape[1])
    d_tot = d_in + d_aux
    h_dim = int(params["w1"].shape[-1])
    o_max = int(params["w3"].shape[-1])
    h_pad = _round_up(h_dim, 128)     # lane-dense hidden width
    o_pad = _round_up(o_max, 128)     # lane-dense output width

    # ---- wrapper-side weight prep (layout plumbing, done once) ---------------
    # masked_fill folded into the x rows of W1: (x*(1-m)) @ W1 == x @ (W1 w/ masked rows zeroed).
    mask_rows = jnp.repeat(masks.astype(jnp.float32), np.asarray(in_size_list),
                           axis=1, total_repeat_length=d_in)                 # (v, d_in)
    keep = jnp.concatenate([1.0 - mask_rows,
                            jnp.ones((v_num, d_aux), jnp.float32)], axis=1)  # (v, d_tot)
    w1m = params["w1"] * keep[:, :, None]                                    # (v, d_tot, H) f32
    # Pad H -> h_pad and fuse the per-head layer-1 weights along the lane dim.
    w1p = jnp.pad(w1m, ((0, 0), (0, 0), (0, h_pad - h_dim)))
    w1_all = jnp.transpose(w1p, (1, 0, 2)).reshape(d_tot, v_num * h_pad).astype(compute_dtype)
    b1_all = jnp.pad(params["b1"], ((0, 0), (0, 0), (0, h_pad - h_dim))
                     ).reshape(1, v_num * h_pad)                             # f32
    w2p = jnp.pad(params["w2"],
                  ((0, 0), (0, h_pad - h_dim), (0, h_pad - h_dim))).astype(compute_dtype)
    b2p = jnp.pad(params["b2"], ((0, 0), (0, 0), (0, h_pad - h_dim)))        # f32
    w3p = jnp.pad(params["w3"],
                  ((0, 0), (0, h_pad - h_dim), (0, o_pad - o_max))).astype(compute_dtype)
    b3p = jnp.pad(params["b3"], ((0, 0), (0, 0), (0, o_pad - o_max)))        # f32

    # ---- batch tiling ---------------------------------------------------------
    n_aligned = _round_up(max(N, 1), 8)
    bn = min(int(block_n), n_aligned)
    # Keep >=2 grid steps when the batch allows it so the "parallel" axis can be
    # split across v7x's two TensorCores (no cost on single-TC v5e/v6e).
    if bn >= n_aligned and n_aligned >= 16:
        bn = _round_up((n_aligned + 1) // 2, 8)
    n_pad = _round_up(N, bn)
    xa = jnp.concatenate([inputs, aux_inputs], axis=1).astype(compute_dtype)  # (N, d_tot)
    if n_pad != N:
        xa = jnp.pad(xa, ((0, n_pad - N), (0, 0)))
    grid = (n_pad // bn,)

    # ---- explicit VMEM budget (v5e default scoped 16 MiB; v7x 64 MiB physical) -
    itemsize_c = compute_dtype.itemsize
    itemsize_o = out_dtype.itemsize
    weight_bytes = int((w1_all.size + w2p.size + w3p.size) * itemsize_c
                       + (b1_all.size + b2p.size + b3p.size) * 4)
    stream_bytes = 2 * bn * d_tot * itemsize_c + 2 * bn * v_num * o_pad * itemsize_o
    interm_bytes = 6 * bn * v_num * h_pad * 4        # f32 z1/h1/z2/h2 headroom
    vmem_limit = int(min(64 * 2**20,
                         max(32 * 2**20,
                             int(1.25 * (2 * weight_bytes + stream_bytes + interm_bytes)))))

    kernel = _build_fused_kernel(v_num, h_pad, o_pad, compute_dtype)

    def _run(single_buffer_weights):
        in_specs = [
            pl.BlockSpec((bn, d_tot), lambda i: (i, 0)),          # xa batch tile
            _const_spec(w1_all, single_buffer_weights),
            _const_spec(b1_all, single_buffer_weights),
            _const_spec(w2p, single_buffer_weights),
            _const_spec(b2p, single_buffer_weights),
            _const_spec(w3p, single_buffer_weights),
            _const_spec(b3p, single_buffer_weights),
        ]
        return pl.pallas_call(
            kernel,
            out_shape=jax.ShapeDtypeStruct((n_pad, v_num * o_pad), out_dtype),
            grid_spec=pltpu.PrefetchScalarGridSpec(
                num_scalar_prefetch=0,
                grid=grid,
                in_specs=in_specs,
                out_specs=pl.BlockSpec((bn, v_num * o_pad), lambda i: (i, 0)),
            ),
            compiler_params=pltpu.CompilerParams(
                dimension_semantics=("parallel",),
                vmem_limit_bytes=vmem_limit),
        )(xa, w1_all, b1_all, w2p, b2p, w3p, b3p)

    try:
        out = _run(True)
    except Exception:
        # pl.Buffered(1) single-buffering of resident weights not supported on this
        # jax version/backend -> fall back to default double-buffered weight specs.
        out = _run(False)

    # Per-variable views: slice the real columns off the lane-dense slab, return f32.
    return [out[:N, v * o_pad: v * o_pad + in_size_list[v]].astype(jnp.float32)
            for v in range(v_num)]


def functional_net_reference(inputs, masks, aux_inputs, params, in_size_list,
                             compute_dtype=jnp.float32):
    """Pure-JAX mirror of the PyTorch forward. When compute_dtype != float32,
    matmul operands are rounded to compute_dtype (same mixed-precision contract
    as the kernel: low-precision operands, f32 accumulation)."""
    v_num = len(in_size_list)
    d_in = int(np.sum(in_size_list))
    if aux_inputs is None:
        aux_inputs = jnp.zeros((inputs.shape[0], 0), inputs.dtype)
    rd = lambda a: a.astype(compute_dtype).astype(jnp.float32)
    outs = []
    for i in range(v_num):
        m = jnp.repeat(masks[i].astype(jnp.float32), np.asarray(in_size_list),
                       total_repeat_length=d_in)[None, :]             # (1, d_in)
        x = inputs * (1.0 - m)                                        # masked_fill(mask, 0)
        xa = jnp.concatenate([x, aux_inputs], axis=1)
        z1 = rd(xa) @ rd(params["w1"][i]) + params["b1"][i]
        h1 = jnp.where(z1 > 0, z1, 0.1 * z1)
        z2 = rd(h1) @ rd(params["w2"][i]) + params["b2"][i]
        h2 = jnp.where(z2 > 0, z2, 0.1 * z2)
        o = int(in_size_list[i])
        y = rd(h2) @ rd(params["w3"][i][:, :o]) + params["b3"][i][:, :o]
        outs.append(y)
    return outs


if __name__ == "__main__":
    in_size_list = [4, 6, 6]       # v_num = 3, sum = 16
    aux_size_list = [8]            # sum = 8 -> i_dim = 24, h_dim = 96
    N = 8

    key = jax.random.PRNGKey(0)
    k_in, k_aux, k_mask, k_par = jax.random.split(key, 4)

    inputs = jax.random.normal(k_in, (N, int(np.sum(in_size_list))), jnp.float32)
    aux_inputs = jax.random.normal(k_aux, (N, int(np.sum(aux_size_list))), jnp.float32)
    masks = jax.random.bernoulli(
        k_mask, 0.5, (len(in_size_list), len(in_size_list))).astype(jnp.int32)
    params = make_params(k_par, in_size_list, aux_size_list)

    # float32 path: faithful to the PyTorch f32 forward.
    outs32 = functional_net_forward(inputs, masks, aux_inputs, params, in_size_list,
                                    compute_dtype=jnp.float32)
    outs32 = [jax.block_until_ready(o) for o in outs32]
    refs32 = functional_net_reference(inputs, masks, aux_inputs, params, in_size_list,
                                      compute_dtype=jnp.float32)
    for o, r, sz in zip(outs32, refs32, in_size_list):
        assert o.shape == (N, sz), (o.shape, (N, sz))
        np.testing.assert_allclose(np.asarray(o), np.asarray(r), rtol=5e-3, atol=5e-3)

    # bf16 operand/output path (default; bf16-native MXU, f32 accumulation).
    outs16 = functional_net_forward(inputs, masks, aux_inputs, params, in_size_list,
                                    compute_dtype=jnp.bfloat16)
    outs16 = [jax.block_until_ready(o) for o in outs16]
    refs16 = functional_net_reference(inputs, masks, aux_inputs, params, in_size_list,
                                      compute_dtype=jnp.bfloat16)
    for o, r, sz in zip(outs16, refs16, in_size_list):
        assert o.shape == (N, sz), (o.shape, (N, sz))
        np.testing.assert_allclose(np.asarray(o), np.asarray(r), rtol=2e-2, atol=2e-2)

    print("KERNEL_OK")
</pallas_src>

<mosaic_0001>
module attributes {stable_mosaic.version = 11 : i64} {
  func.func @kernel(%arg0: i32, %arg1: memref<8x24xf32, #tpu.memory_space<vmem>>, %arg2: memref<24x384xf32, #tpu.memory_space<vmem>>, %arg3: memref<1x384xf32, #tpu.memory_space<vmem>>, %arg4: memref<3x128x128xf32, #tpu.memory_space<vmem>>, %arg5: memref<3x1x128xf32, #tpu.memory_space<vmem>>, %arg6: memref<3x128x128xf32, #tpu.memory_space<vmem>>, %arg7: memref<3x1x128xf32, #tpu.memory_space<vmem>>, %arg8: memref<8x384xf32, #tpu.memory_space<vmem>>) attributes {dimension_semantics = [#tpu.dimension_semantics<parallel>], iteration_bounds = array<i64: 1>, scalar_prefetch = 0 : i64, scratch_operands = 0 : i64, tpu.core_type = #tpu.core_type<tc>, window_params = [{transform_indices = @transform_0, window_bounds = array<i64: 8, 24>}, {pipeline_mode = #tpu.pipeline_mode<synchronous>, transform_indices = @transform_1, window_bounds = array<i64: 24, 384>}, {pipeline_mode = #tpu.pipeline_mode<synchronous>, transform_indices = @transform_2, window_bounds = array<i64: 1, 384>}, {pipeline_mode = #tpu.pipeline_mode<synchronous>, transform_indices = @transform_3, window_bounds = array<i64: 3, 128, 128>}, {pipeline_mode = #tpu.pipeline_mode<synchronous>, transform_indices = @transform_4, window_bounds = array<i64: 3, 1, 128>}, {pipeline_mode = #tpu.pipeline_mode<synchronous>, transform_indices = @transform_5, window_bounds = array<i64: 3, 128, 128>}, {pipeline_mode = #tpu.pipeline_mode<synchronous>, transform_indices = @transform_6, window_bounds = array<i64: 3, 1, 128>}, {transform_indices = @transform_7, window_bounds = array<i64: 8, 384>}]} {
    %c0 = arith.constant 0 : index
    %c0_0 = arith.constant 0 : index
    %0 = vector.load %arg1[%c0, %c0_0] : memref<8x24xf32, #tpu.memory_space<vmem>>, vector<8x24xf32>
    %c0_1 = arith.constant 0 : index
    %c0_2 = arith.constant 0 : index
    %1 = vector.load %arg2[%c0_1, %c0_2] : memref<24x384xf32, #tpu.memory_space<vmem>>, vector<24x384xf32>
    %cst = arith.constant dense<0.000000e+00> : vector<8x384xf32>
    %2 = tpu.matmul %0, %1, %cst {dimension_numbers = #tpu.dot_dimension_numbers<[1], [0], [0], [1], [0, 0, 1, 1], [], []>} : vector<8x24xf32>, vector<24x384xf32>, vector<8x384xf32> -> vector<8x384xf32>
    %c0_3 = arith.constant 0 : index
    %c0_4 = arith.constant 0 : index
    %3 = vector.load %arg3[%c0_3, %c0_4] : memref<1x384xf32, #tpu.memory_space<vmem>>, vector<1x384xf32>
    %4 = vector.broadcast %3 : vector<1x384xf32> to vector<8x384xf32>
    %5 = arith.addf %2, %4 : vector<8x384xf32>
    %cst_5 = arith.constant 1.000000e-01 : f32
    %6 = vector.broadcast %cst_5 : f32 to vector<8x384xf32>
    %7 = arith.mulf %6, %5 : vector<8x384xf32>
    %8 = arith.maximumf %5, %7 : vector<8x384xf32>
    %9 = vector.extract_strided_slice %8 {offsets = [0, 0], sizes = [8, 128], strides = [1, 1]} : vector<8x384xf32> to vector<8x128xf32>
    %c0_6 = arith.constant 0 : index
    %c0_7 = arith.constant 0 : index
    %c0_8 = arith.constant 0 : index
    %10 = vector.load %arg4[%c0_6, %c0_7, %c0_8] : memref<3x128x128xf32, #tpu.memory_space<vmem>>, vector<1x128x128xf32>
    %11 = vector.shape_cast %10 : vector<1x128x128xf32> to vector<128x128xf32>
    %cst_9 = arith.constant dense<0.000000e+00> : vector<8x128xf32>
    %12 = tpu.matmul %9, %11, %cst_9 {dimension_numbers = #tpu.dot_dimension_numbers<[1], [0], [0], [1], [0, 0, 1, 1], [], []>} : vector<8x128xf32>, vector<128x128xf32>, vector<8x128xf32> -> vector<8x128xf32>
    %c0_10 = arith.constant 0 : index
    %c0_11 = arith.constant 0 : index
    %c0_12 = arith.constant 0 : index
    %13 = vector.load %arg5[%c0_10, %c0_11, %c0_12] : memref<3x1x128xf32, #tpu.memory_space<vmem>>, vector<1x1x128xf32>
    %14 = vector.shape_cast %13 : vector<1x1x128xf32> to vector<1x128xf32>
    %15 = vector.broadcast %14 : vector<1x128xf32> to vector<8x128xf32>
    %16 = arith.addf %12, %15 : vector<8x128xf32>
    %cst_13 = arith.constant 1.000000e-01 : f32
    %17 = vector.broadcast %cst_13 : f32 to vector<8x128xf32>
    %18 = arith.mulf %17, %16 : vector<8x128xf32>
    %19 = arith.maximumf %16, %18 : vector<8x128xf32>
    %c0_14 = arith.constant 0 : index
    %c0_15 = arith.constant 0 : index
    %c0_16 = arith.constant 0 : index
    %20 = vector.load %arg6[%c0_14, %c0_15, %c0_16] : memref<3x128x128xf32, #tpu.memory_space<vmem>>, vector<1x128x128xf32>
    %21 = vector.shape_cast %20 : vector<1x128x128xf32> to vector<128x128xf32>
    %cst_17 = arith.constant dense<0.000000e+00> : vector<8x128xf32>
    %22 = tpu.matmul %19, %21, %cst_17 {dimension_numbers = #tpu.dot_dimension_numbers<[1], [0], [0], [1], [0, 0, 1, 1], [], []>} : vector<8x128xf32>, vector<128x128xf32>, vector<8x128xf32> -> vector<8x128xf32>
    %c0_18 = arith.constant 0 : index
    %c0_19 = arith.constant 0 : index
    %c0_20 = arith.constant 0 : index
    %23 = vector.load %arg7[%c0_18, %c0_19, %c0_20] : memref<3x1x128xf32, #tpu.memory_space<vmem>>, vector<1x1x128xf32>
    %24 = vector.shape_cast %23 : vector<1x1x128xf32> to vector<1x128xf32>
    %25 = vector.broadcast %24 : vector<1x128xf32> to vector<8x128xf32>
    %26 = arith.addf %22, %25 : vector<8x128xf32>
    %c0_21 = arith.constant 0 : index
    %c0_22 = arith.constant 0 : index
    %27 = vector.load %arg8[%c0_21, %c0_22] : memref<8x384xf32, #tpu.memory_space<vmem>>, vector<8x128xf32>
    tpu.vector_store %arg8[%c0_21, %c0_22], %26 {strides = array<i32>} : memref<8x384xf32, #tpu.memory_space<vmem>>, vector<8x128xf32>,
    %28 = vector.extract_strided_slice %8 {offsets = [0, 128], sizes = [8, 128], strides = [1, 1]} : vector<8x384xf32> to vector<8x128xf32>
    %c1 = arith.constant 1 : index
    %c0_23 = arith.constant 0 : index
    %c0_24 = arith.constant 0 : index
    %29 = vector.load %arg4[%c1, %c0_23, %c0_24] : memref<3x128x128xf32, #tpu.memory_space<vmem>>, vector<1x128x128xf32>
    %30 = vector.shape_cast %29 : vector<1x128x128xf32> to vector<128x128xf32>
    %cst_25 = arith.constant dense<0.000000e+00> : vector<8x128xf32>
    %31 = tpu.matmul %28, %30, %cst_25 {dimension_numbers = #tpu.dot_dimension_numbers<[1], [0], [0], [1], [0, 0, 1, 1], [], []>} : vector<8x128xf32>, vector<128x128xf32>, vector<8x128xf32> -> vector<8x128xf32>
    %c1_26 = arith.constant 1 : index
    %c0_27 = arith.constant 0 : index
    %c0_28 = arith.constant 0 : index
    %32 = vector.load %arg5[%c1_26, %c0_27, %c0_28] : memref<3x1x128xf32, #tpu.memory_space<vmem>>, vector<1x1x128xf32>
    %33 = vector.shape_cast %32 : vector<1x1x128xf32> to vector<1x128xf32>
    %34 = vector.broadcast %33 : vector<1x128xf32> to vector<8x128xf32>
    %35 = arith.addf %31, %34 : vector<8x128xf32>
    %cst_29 = arith.constant 1.000000e-01 : f32
    %36 = vector.broadcast %cst_29 : f32 to vector<8x128xf32>
    %37 = arith.mulf %36, %35 : vector<8x128xf32>
    %38 = arith.maximumf %35, %37 : vector<8x128xf32>
    %c1_30 = arith.constant 1 : index
    %c0_31 = arith.constant 0 : index
    %c0_32 = arith.constant 0 : index
    %39 = vector.load %arg6[%c1_30, %c0_31, %c0_32] : memref<3x128x128xf32, #tpu.memory_space<vmem>>, vector<1x128x128xf32>
    %40 = vector.shape_cast %39 : vector<1x128x128xf32> to vector<128x128xf32>
    %cst_33 = arith.constant dense<0.000000e+00> : vector<8x128xf32>
    %41 = tpu.matmul %38, %40, %cst_33 {dimension_numbers = #tpu.dot_dimension_numbers<[1], [0], [0], [1], [0, 0, 1, 1], [], []>} : vector<8x128xf32>, vector<128x128xf32>, vector<8x128xf32> -> vector<8x128xf32>
    %c1_34 = arith.constant 1 : index
    %c0_35 = arith.constant 0 : index
    %c0_36 = arith.constant 0 : index
    %42 = vector.load %arg7[%c1_34, %c0_35, %c0_36] : memref<3x1x128xf32, #tpu.memory_space<vmem>>, vector<1x1x128xf32>
    %43 = vector.shape_cast %42 : vector<1x1x128xf32> to vector<1x128xf32>
    %44 = vector.broadcast %43 : vector<1x128xf32> to vector<8x128xf32>
    %45 = arith.addf %41, %44 : vector<8x128xf32>
    %c0_37 = arith.constant 0 : index
    %c128 = arith.constant 128 : index
    %46 = vector.load %arg8[%c0_37, %c128] : memref<8x384xf32, #tpu.memory_space<vmem>>, vector<8x128xf32>
    tpu.vector_store %arg8[%c0_37, %c128], %45 {strides = array<i32>} : memref<8x384xf32, #tpu.memory_space<vmem>>, vector<8x128xf32>,
    %47 = vector.extract_strided_slice %8 {offsets = [0, 256], sizes = [8, 128], strides = [1, 1]} : vector<8x384xf32> to vector<8x128xf32>
    %c2 = arith.constant 2 : index
    %c0_38 = arith.constant 0 : index
    %c0_39 = arith.constant 0 : index
    %48 = vector.load %arg4[%c2, %c0_38, %c0_39] : memref<3x128x128xf32, #tpu.memory_space<vmem>>, vector<1x128x128xf32>
    %49 = vector.shape_cast %48 : vector<1x128x128xf32> to vector<128x128xf32>
    %cst_40 = arith.constant dense<0.000000e+00> : vector<8x128xf32>
    %50 = tpu.matmul %47, %49, %cst_40 {dimension_numbers = #tpu.dot_dimension_numbers<[1], [0], [0], [1], [0, 0, 1, 1], [], []>} : vector<8x128xf32>, vector<128x128xf32>, vector<8x128xf32> -> vector<8x128xf32>
    %c2_41 = arith.constant 2 : index
    %c0_42 = arith.constant 0 : index
    %c0_43 = arith.constant 0 : index
    %51 = vector.load %arg5[%c2_41, %c0_42, %c0_43] : memref<3x1x128xf32, #tpu.memory_space<vmem>>, vector<1x1x128xf32>
    %52 = vector.shape_cast %51 : vector<1x1x128xf32> to vector<1x128xf32>
    %53 = vector.broadcast %52 : vector<1x128xf32> to vector<8x128xf32>
    %54 = arith.addf %50, %53 : vector<8x128xf32>
    %cst_44 = arith.constant 1.000000e-01 : f32
    %55 = vector.broadcast %cst_44 : f32 to vector<8x128xf32>
    %56 = arith.mulf %55, %54 : vector<8x128xf32>
    %57 = arith.maximumf %54, %56 : vector<8x128xf32>
    %c2_45 = arith.constant 2 : index
    %c0_46 = arith.constant 0 : index
    %c0_47 = arith.constant 0 : index
    %58 = vector.load %arg6[%c2_45, %c0_46, %c0_47] : memref<3x128x128xf32, #tpu.memory_space<vmem>>, vector<1x128x128xf32>
    %59 = vector.shape_cast %58 : vector<1x128x128xf32> to vector<128x128xf32>
    %cst_48 = arith.constant dense<0.000000e+00> : vector<8x128xf32>
    %60 = tpu.matmul %57, %59, %cst_48 {dimension_numbers = #tpu.dot_dimension_numbers<[1], [0], [0], [1], [0, 0, 1, 1], [], []>} : vector<8x128xf32>, vector<128x128xf32>, vector<8x128xf32> -> vector<8x128xf32>
    %c2_49 = arith.constant 2 : index
    %c0_50 = arith.constant 0 : index
    %c0_51 = arith.constant 0 : index
    %61 = vector.load %arg7[%c2_49, %c0_50, %c0_51] : memref<3x1x128xf32, #tpu.memory_space<vmem>>, vector<1x1x128xf32>
    %62 = vector.shape_cast %61 : vector<1x1x128xf32> to vector<1x128xf32>
    %63 = vector.broadcast %62 : vector<1x128xf32> to vector<8x128xf32>
    %64 = arith.addf %60, %63 : vector<8x128xf32>
    %c0_52 = arith.constant 0 : index
    %c256 = arith.constant 256 : index
    %65 = vector.load %arg8[%c0_52, %c256] : memref<8x384xf32, #tpu.memory_space<vmem>>, vector<8x128xf32>
    tpu.vector_store %arg8[%c0_52, %c256], %64 {strides = array<i32>} : memref<8x384xf32, #tpu.memory_space<vmem>>, vector<8x128xf32>,
    return
  }
  func.func @transform_0(%arg0: i32) -> (i32, i32) {
    %c0_i32 = arith.constant 0 : i32
    %c0_i32_0 = arith.constant 0 : i32
    return %arg0, %c0_i32 : i32, i32
  }
  func.func @transform_1(%arg0: i32) -> (i32, i32) {
    %c0_i32 = arith.constant 0 : i32
    %c0_i32_0 = arith.constant 0 : i32
    %c0_i32_1 = arith.constant 0 : i32
    return %c0_i32, %c0_i32_0 : i32, i32
  }
  func.func @transform_2(%arg0: i32) -> (i32, i32) {
    %c0_i32 = arith.constant 0 : i32
    %c0_i32_0 = arith.constant 0 : i32
    %c0_i32_1 = arith.constant 0 : i32
    return %c0_i32, %c0_i32_0 : i32, i32
  }
  func.func @transform_3(%arg0: i32) -> (i32, i32, i32) {
    %c0_i32 = arith.constant 0 : i32
    %c0_i32_0 = arith.constant 0 : i32
    %c0_i32_1 = arith.constant 0 : i32
    %c0_i32_2 = arith.constant 0 : i32
    return %c0_i32, %c0_i32_0, %c0_i32_1 : i32, i32, i32
  }
  func.func @transform_4(%arg0: i32) -> (i32, i32, i32) {
    %c0_i32 = arith.constant 0 : i32
    %c0_i32_0 = arith.constant 0 : i32
    %c0_i32_1 = arith.constant 0 : i32
    %c0_i32_2 = arith.constant 0 : i32
    return %c0_i32, %c0_i32_0, %c0_i32_1 : i32, i32, i32
  }
  func.func @transform_5(%arg0: i32) -> (i32, i32, i32) {
    %c0_i32 = arith.constant 0 : i32
    %c0_i32_0 = arith.constant 0 : i32
    %c0_i32_1 = arith.constant 0 : i32
    %c0_i32_2 = arith.constant 0 : i32
    return %c0_i32, %c0_i32_0, %c0_i32_1 : i32, i32, i32
  }
  func.func @transform_6(%arg0: i32) -> (i32, i32, i32) {
    %c0_i32 = arith.constant 0 : i32
    %c0_i32_0 = arith.constant 0 : i32
    %c0_i32_1 = arith.constant 0 : i32
    %c0_i32_2 = arith.constant 0 : i32
    return %c0_i32, %c0_i32_0, %c0_i32_1 : i32, i32, i32
  }
  func.func @transform_7(%arg0: i32) -> (i32, i32) {
    %c0_i32 = arith.constant 0 : i32
    %c0_i32_0 = arith.constant 0 : i32
    return %arg0, %c0_i32 : i32, i32
  }
}

module attributes {stable_mosaic.version = 11 : i64} {
  func.func @kernel(%arg0: i32, %arg1: memref<8x24xf32, #tpu.memory_space<vmem>>, %arg2: memref<24x384xf32, #tpu.memory_space<vmem>>, %arg3: memref<1x384xf32, #tpu.memory_space<vmem>>, %arg4: memref<3x128x128xf32, #tpu.memory_space<vmem>>, %arg5: memref<3x1x128xf32, #tpu.memory_space<vmem>>, %arg6: memref<3x128x128xf32, #tpu.memory_space<vmem>>, %arg7: memref<3x1x128xf32, #tpu.memory_space<vmem>>, %arg8: memref<8x384xf32, #tpu.memory_space<vmem>>) attributes {dimension_semantics = [#tpu.dimension_semantics<parallel>], iteration_bounds = array<i64: 1>, scalar_prefetch = 0 : i64, scratch_operands = 0 : i64, tpu.core_type = #tpu.core_type<tc>, window_params = [{transform_indices = @transform_0, window_bounds = array<i64: 8, 24>}, {pipeline_mode = #tpu.pipeline_mode<synchronous>, transform_indices = @transform_1, window_bounds = array<i64: 24, 384>}, {pipeline_mode = #tpu.pipeline_mode<synchronous>, transform_indices = @transform_2, window_bounds = array<i64: 1, 384>}, {pipeline_mode = #tpu.pipeline_mode<synchronous>, transform_indices = @transform_3, window_bounds = array<i64: 3, 128, 128>}, {pipeline_mode = #tpu.pipeline_mode<synchronous>, transform_indices = @transform_4, window_bounds = array<i64: 3, 1, 128>}, {pipeline_mode = #tpu.pipeline_mode<synchronous>, transform_indices = @transform_5, window_bounds = array<i64: 3, 128, 128>}, {pipeline_mode = #tpu.pipeline_mode<synchronous>, transform_indices = @transform_6, window_bounds = array<i64: 3, 1, 128>}, {transform_indices = @transform_7, window_bounds = array<i64: 8, 384>}]} {
    %c0 = arith.constant 0 : index
    %c0_0 = arith.constant 0 : index
    %0 = vector.load %arg1[%c0, %c0_0] : memref<8x24xf32, #tpu.memory_space<vmem>>, vector<8x24xf32>
    %c0_1 = arith.constant 0 : index
    %c0_2 = arith.constant 0 : index
    %1 = vector.load %arg2[%c0_1, %c0_2] : memref<24x384xf32, #tpu.memory_space<vmem>>, vector<24x384xf32>
    %cst = arith.constant dense<0.000000e+00> : vector<8x384xf32>
    %2 = tpu.matmul %0, %1, %cst {dimension_numbers = #tpu.dot_dimension_numbers<[1], [0], [0], [1], [0, 0, 1, 1], [], []>} : vector<8x24xf32>, vector<24x384xf32>, vector<8x384xf32> -> vector<8x384xf32>
    %c0_3 = arith.constant 0 : index
    %c0_4 = arith.constant 0 : index
    %3 = vector.load %arg3[%c0_3, %c0_4] : memref<1x384xf32, #tpu.memory_space<vmem>>, vector<1x384xf32>
    %4 = vector.broadcast %3 : vector<1x384xf32> to vector<8x384xf32>
    %5 = arith.addf %2, %4 : vector<8x384xf32>
    %cst_5 = arith.constant 1.000000e-01 : f32
    %6 = vector.broadcast %cst_5 : f32 to vector<8x384xf32>
    %7 = arith.mulf %6, %5 : vector<8x384xf32>
    %8 = arith.maximumf %5, %7 : vector<8x384xf32>
    %9 = vector.extract_strided_slice %8 {offsets = [0, 0], sizes = [8, 128], strides = [1, 1]} : vector<8x384xf32> to vector<8x128xf32>
    %c0_6 = arith.constant 0 : index
    %c0_7 = arith.constant 0 : index
    %c0_8 = arith.constant 0 : index
    %10 = vector.load %arg4[%c0_6, %c0_7, %c0_8] : memref<3x128x128xf32, #tpu.memory_space<vmem>>, vector<1x128x128xf32>
    %11 = vector.shape_cast %10 : vector<1x128x128xf32> to vector<128x128xf32>
    %cst_9 = arith.constant dense<0.000000e+00> : vector<8x128xf32>
    %12 = tpu.matmul %9, %11, %cst_9 {dimension_numbers = #tpu.dot_dimension_numbers<[1], [0], [0], [1], [0, 0, 1, 1], [], []>} : vector<8x128xf32>, vector<128x128xf32>, vector<8x128xf32> -> vector<8x128xf32>
    %c0_10 = arith.constant 0 : index
    %c0_11 = arith.constant 0 : index
    %c0_12 = arith.constant 0 : index
    %13 = vector.load %arg5[%c0_10, %c0_11, %c0_12] : memref<3x1x128xf32, #tpu.memory_space<vmem>>, vector<1x1x128xf32>
    %14 = vector.shape_cast %13 : vector<1x1x128xf32> to vector<1x128xf32>
    %15 = vector.broadcast %14 : vector<1x128xf32> to vector<8x128xf32>
    %16 = arith.addf %12, %15 : vector<8x128xf32>
    %cst_13 = arith.constant 1.000000e-01 : f32
    %17 = vector.broadcast %cst_13 : f32 to vector<8x128xf32>
    %18 = arith.mulf %17, %16 : vector<8x128xf32>
    %19 = arith.maximumf %16, %18 : vector<8x128xf32>
    %c0_14 = arith.constant 0 : index
    %c0_15 = arith.constant 0 : index
    %c0_16 = arith.constant 0 : index
    %20 = vector.load %arg6[%c0_14, %c0_15, %c0_16] : memref<3x128x128xf32, #tpu.memory_space<vmem>>, vector<1x128x128xf32>
    %21 = vector.shape_cast %20 : vector<1x128x128xf32> to vector<128x128xf32>
    %cst_17 = arith.constant dense<0.000000e+00> : vector<8x128xf32>
    %22 = tpu.matmul %19, %21, %cst_17 {dimension_numbers = #tpu.dot_dimension_numbers<[1], [0], [0], [1], [0, 0, 1, 1], [], []>} : vector<8x128xf32>, vector<128x128xf32>, vector<8x128xf32> -> vector<8x128xf32>
    %c0_18 = arith.constant 0 : index
    %c0_19 = arith.constant 0 : index
    %c0_20 = arith.constant 0 : index
    %23 = vector.load %arg7[%c0_18, %c0_19, %c0_20] : memref<3x1x128xf32, #tpu.memory_space<vmem>>, vector<1x1x128xf32>
    %24 = vector.shape_cast %23 : vector<1x1x128xf32> to vector<1x128xf32>
    %25 = vector.broadcast %24 : vector<1x128xf32> to vector<8x128xf32>
    %26 = arith.addf %22, %25 : vector<8x128xf32>
    %c0_21 = arith.constant 0 : index
    %c0_22 = arith.constant 0 : index
    %27 = vector.load %arg8[%c0_21, %c0_22] : memref<8x384xf32, #tpu.memory_space<vmem>>, vector<8x128xf32>
    tpu.vector_store %arg8[%c0_21, %c0_22], %26 {strides = array<i32>} : memref<8x384xf32, #tpu.memory_space<vmem>>, vector<8x128xf32>,
    %28 = vector.extract_strided_slice %8 {offsets = [0, 128], sizes = [8, 128], strides = [1, 1]} : vector<8x384xf32> to vector<8x128xf32>
    %c1 = arith.constant 1 : index
    %c0_23 = arith.constant 0 : index
    %c0_24 = arith.constant 0 : index
    %29 = vector.load %arg4[%c1, %c0_23, %c0_24] : memref<3x128x128xf32, #tpu.memory_space<vmem>>, vector<1x128x128xf32>
    %30 = vector.shape_cast %29 : vector<1x128x128xf32> to vector<128x128xf32>
    %cst_25 = arith.constant dense<0.000000e+00> : vector<8x128xf32>
    %31 = tpu.matmul %28, %30, %cst_25 {dimension_numbers = #tpu.dot_dimension_numbers<[1], [0], [0], [1], [0, 0, 1, 1], [], []>} : vector<8x128xf32>, vector<128x128xf32>, vector<8x128xf32> -> vector<8x128xf32>
    %c1_26 = arith.constant 1 : index
    %c0_27 = arith.constant 0 : index
    %c0_28 = arith.constant 0 : index
    %32 = vector.load %arg5[%c1_26, %c0_27, %c0_28] : memref<3x1x128xf32, #tpu.memory_space<vmem>>, vector<1x1x128xf32>
    %33 = vector.shape_cast %32 : vector<1x1x128xf32> to vector<1x128xf32>
    %34 = vector.broadcast %33 : vector<1x128xf32> to vector<8x128xf32>
    %35 = arith.addf %31, %34 : vector<8x128xf32>
    %cst_29 = arith.constant 1.000000e-01 : f32
    %36 = vector.broadcast %cst_29 : f32 to vector<8x128xf32>
    %37 = arith.mulf %36, %35 : vector<8x128xf32>
    %38 = arith.maximumf %35, %37 : vector<8x128xf32>
    %c1_30 = arith.constant 1 : index
    %c0_31 = arith.constant 0 : index
    %c0_32 = arith.constant 0 : index
    %39 = vector.load %arg6[%c1_30, %c0_31, %c0_32] : memref<3x128x128xf32, #tpu.memory_space<vmem>>, vector<1x128x128xf32>
    %40 = vector.shape_cast %39 : vector<1x128x128xf32> to vector<128x128xf32>
    %cst_33 = arith.constant dense<0.000000e+00> : vector<8x128xf32>
    %41 = tpu.matmul %38, %40, %cst_33 {dimension_numbers = #tpu.dot_dimension_numbers<[1], [0], [0], [1], [0, 0, 1, 1], [], []>} : vector<8x128xf32>, vector<128x128xf32>, vector<8x128xf32> -> vector<8x128xf32>
    %c1_34 = arith.constant 1 : index
    %c0_35 = arith.constant 0 : index
    %c0_36 = arith.constant 0 : index
    %42 = vector.load %arg7[%c1_34, %c0_35, %c0_36] : memref<3x1x128xf32, #tpu.memory_space<vmem>>, vector<1x1x128xf32>
    %43 = vector.shape_cast %42 : vector<1x1x128xf32> to vector<1x128xf32>
    %44 = vector.broadcast %43 : vector<1x128xf32> to vector<8x128xf32>
    %45 = arith.addf %41, %44 : vector<8x128xf32>
    %c0_37 = arith.constant 0 : index
    %c128 = arith.constant 128 : index
    %46 = vector.load %arg8[%c0_37, %c128] : memref<8x384xf32, #tpu.memory_space<vmem>>, vector<8x128xf32>
    tpu.vector_store %arg8[%c0_37, %c128], %45 {strides = array<i32>} : memref<8x384xf32, #tpu.memory_space<vmem>>, vector<8x128xf32>,
    %47 = vector.extract_strided_slice %8 {offsets = [0, 256], sizes = [8, 128], strides = [1, 1]} : vector<8x384xf32> to vector<8x128xf32>
    %c2 = arith.constant 2 : index
    %c0_38 = arith.constant 0 : index
    %c0_39 = arith.constant 0 : index
    %48 = vector.load %arg4[%c2, %c0_38, %c0_39] : memref<3x128x128xf32, #tpu.memory_space<vmem>>, vector<1x128x128xf32>
    %49 = vector.shape_cast %48 : vector<1x128x128xf32> to vector<128x128xf32>
    %cst_40 = arith.constant dense<0.000000e+00> : vector<8x128xf32>
    %50 = tpu.matmul %47, %49, %cst_40 {dimension_numbers = #tpu.dot_dimension_numbers<[1], [0], [0], [1], [0, 0, 1, 1], [], []>} : vector<8x128xf32>, vector<128x128xf32>, vector<8x128xf32> -> vector<8x128xf32>
    %c2_41 = arith.constant 2 : index
    %c0_42 = arith.constant 0 : index
    %c0_43 = arith.constant 0 : index
    %51 = vector.load %arg5[%c2_41, %c0_42, %c0_43] : memref<3x1x128xf32, #tpu.memory_space<vmem>>, vector<1x1x128xf32>
    %52 = vector.shape_cast %51 : vector<1x1x128xf32> to vector<1x128xf32>
    %53 = vector.broadcast %52 : vector<1x128xf32> to vector<8x128xf32>
    %54 = arith.addf %50, %53 : vector<8x128xf32>
    %cst_44 = arith.constant 1.000000e-01 : f32
    %55 = vector.broadcast %cst_44 : f32 to vector<8x128xf32>
    %56 = arith.mulf %55, %54 : vector<8x128xf32>
    %57 = arith.maximumf %54, %56 : vector<8x128xf32>
    %c2_45 = arith.constant 2 : index
    %c0_46 = arith.constant 0 : index
    %c0_47 = arith.constant 0 : index
    %58 = vector.load %arg6[%c2_45, %c0_46, %c0_47] : memref<3x128x128xf32, #tpu.memory_space<vmem>>, vector<1x128x128xf32>
    %59 = vector.shape_cast %58 : vector<1x128x128xf32> to vector<128x128xf32>
    %cst_48 = arith.constant dense<0.000000e+00> : vector<8x128xf32>
    %60 = tpu.matmul %57, %59, %cst_48 {dimension_numbers = #tpu.dot_dimension_numbers<[1], [0], [0], [1], [0, 0, 1, 1], [], []>} : vector<8x128xf32>, vector<128x128xf32>, vector<8x128xf32> -> vector<8x128xf32>
    %c2_49 = arith.constant 2 : index
    %c0_50 = arith.constant 0 : index
    %c0_51 = arith.constant 0 : index
    %61 = vector.load %arg7[%c2_49, %c0_50, %c0_51] : memref<3x1x128xf32, #tpu.memory_space<vmem>>, vector<1x1x128xf32>
    %62 = vector.shape_cast %61 : vector<1x1x128xf32> to vector<1x128xf32>
    %63 = vector.broadcast %62 : vector<1x128xf32> to vector<8x128xf32>
    %64 = arith.addf %60, %63 : vector<8x128xf32>
    %c0_52 = arith.constant 0 : index
    %c256 = arith.constant 256 : index
    %65 = vector.load %arg8[%c0_52, %c256] : memref<8x384xf32, #tpu.memory_space<vmem>>, vector<8x128xf32>
    tpu.vector_store %arg8[%c0_52, %c256], %64 {strides = array<i32>} : memref<8x384xf32, #tpu.memory_space<vmem>>, vector<8x128xf32>,
    return
  }
  func.func @transform_0(%arg0: i32) -> (i32, i32) {
    %c0_i32 = arith.constant 0 : i32
    %c0_i32_0 = arith.constant 0 : i32
    return %arg0, %c0_i32 : i32, i32
  }
  func.func @transform_1(%arg0: i32) -> (i32, i32) {
    %c0_i32 = arith.constant 0 : i32
    %c0_i32_0 = arith.constant 0 : i32
    %c0_i32_1 = arith.constant 0 : i32
    return %c0_i32, %c0_i32_0 : i32, i32
  }
  func.func @transform_2(%arg0: i32) -> (i32, i32) {
    %c0_i32 = arith.constant 0 : i32
    %c0_i32_0 = arith.constant 0 : i32
    %c0_i32_1 = arith.constant 0 : i32
    return %c0_i32, %c0_i32_0 : i32, i32
  }
  func.func @transform_3(%arg0: i32) -> (i32, i32, i32) {
    %c0_i32 = arith.constant 0 : i32
    %c0_i32_0 = arith.constant 0 : i32
    %c0_i32_1 = arith.constant 0 : i32
    %c0_i32_2 = arith.constant 0 : i32
    return %c0_i32, %c0_i32_0, %c0_i32_1 : i32, i32, i32
  }
  func.func @transform_4(%arg0: i32) -> (i32, i32, i32) {
    %c0_i32 = arith.constant 0 : i32
    %c0_i32_0 = arith.constant 0 : i32
    %c0_i32_1 = arith.constant 0 : i32
    %c0_i32_2 = arith.constant 0 : i32
    return %c0_i32, %c0_i32_0, %c0_i32_1 : i32, i32, i32
  }
  func.func @transform_5(%arg0: i32) -> (i32, i32, i32) {
    %c0_i32 = arith.constant 0 : i32
    %c0_i32_0 = arith.constant 0 : i32
    %c0_i32_1 = arith.constant 0 : i32
    %c0_i32_2 = arith.constant 0 : i32
    return %c0_i32, %c0_i32_0, %c0_i32_1 : i32, i32, i32
  }
  func.func @transform_6(%arg0: i32) -> (i32, i32, i32) {
    %c0_i32 = arith.constant 0 : i32
    %c0_i32_0 = arith.constant 0 : i32
    %c0_i32_1 = arith.constant 0 : i32
    %c0_i32_2 = arith.constant 0 : i32
    return %c0_i32, %c0_i32_0, %c0_i32_1 : i32, i32, i32
  }
  func.func @transform_7(%arg0: i32) -> (i32, i32) {
    %c0_i32 = arith.constant 0 : i32
    %c0_i32_0 = arith.constant 0 : i32
    return %arg0, %c0_i32 : i32, i32
  }
}

</mosaic_0001>

<llo_original>
// kernel: tpu_custom_call.1
$region0: #{tpu_custom_call.1}
  #allocation0 [shape = 'u32[]', space=smem, size = 0x4, offset = 0x4, fixed_abs, tag = 'smem constant byte address 0x4 - core index']
  #allocation1 [shape = 'u32[144,128]{1,0:T(1,128)}', space=vmem, size = 0x12000, scoped, tag = 'internal scratch']
  %s0 = inlined_call_operand.hbm [shape: f32[8,24], index: 0, kind: input, shape index: {}]
  %s1 = inlined_call_operand.hbm [shape: f32[24,384], index: 1, kind: input, shape index: {}]
  %s2 = inlined_call_operand.vmem [shape: f32[1,384], index: 2, kind: input, shape index: {}]
  %s3 = inlined_call_operand.hbm [shape: f32[3,128,128], index: 3, kind: input, shape index: {}]
  %s4 = inlined_call_operand.vmem [shape: f32[3,1,128], index: 4, kind: input, shape index: {}]
  %s5 = inlined_call_operand.hbm [shape: f32[3,128,128], index: 5, kind: input, shape index: {}]
  %s6 = inlined_call_operand.vmem [shape: f32[3,1,128], index: 6, kind: input, shape index: {}]
  %s7 = inlined_call_operand.hbm [shape: f32[8,384], index: 7, kind: output, shape index: {}]
  %s8 = sld [smem:[#allocation0]]
  $region54: #{tpu_custom_call.1} parent=0
    _
  %s10 = ssub.s32 1, %s8
  %s11 = scalar_select 0, %s10, %s8
  $region1: #{tpu_custom_call.1} parent=0
    #allocation2 [shape = 'u8[4096]{0}', space=vmem, size = 0x1000, scoped, tag = 'input window, operand 0, single buffered']
    #allocation3 [shape = 's32[1]{0}', space=sflag, size = 0x4, scoped, tag = 'scoped memory for tpu_custom_call.1']
    #allocation4 [shape = 's32[1]{0}', space=sflag, size = 0x4, scoped, tag = 'scoped memory for tpu_custom_call.1']
    #allocation5 [shape = 'u8[36864]{0}', space=vmem, size = 0x9000, scoped, tag = 'input window, operand 1, single buffered']
    #allocation6 [shape = 's32[1]{0}', space=sflag, size = 0x4, scoped, tag = 'scoped memory for tpu_custom_call.1']
    #allocation7 [shape = 'u8[196608]{0}', space=vmem, size = 0x30000, scoped, tag = 'input window, operand 3, single buffered']
    #allocation8 [shape = 'u8[196608]{0}', space=vmem, size = 0x30000, scoped, tag = 'input window, operand 5, single buffered']
    #allocation9 [shape = 's32[1]{0}', space=sflag, size = 0x4, scoped, tag = 'scoped memory for tpu_custom_call.1']
    #allocation10 [shape = 'u8[12288]{0}', space=vmem, size = 0x3000, scoped, tag = 'output window, operand 0, single buffered']
    %12 = vsyncpa [#allocation3], 0
    %13 = vsyncpa [#allocation6], 0
    %14 = vsyncpa [#allocation9], 0
    %15 = vsyncpa [#allocation4], 0
    // Predicated region
    $region2: #{tpu_custom_call.1} parent=1 // pred_check
      _
    $region3: #{tpu_custom_call.1} parent=1 // pred_check_branch
      %17 = sbr.rel (0) target = $region5
    $region4: #{tpu_custom_call.1} parent=1 // pred_region
      %s19 = ssub.s32 128, 128
      %20 = vsyncadd [#allocation3], %s19
      %s22 = sshll.u32 [#allocation2], 4
      %s23 = int_to_ptr.vmem [resolvable:$true] %s22
      %25 = dma.hbm_to_vmem [thread:$0]  %s0, 128, %s23, [#allocation3]
    $region5: #{tpu_custom_call.1} parent=1 // pred_fallthru
      _
    // Predicated region
    $region6: #{tpu_custom_call.1} parent=1 // pred_check
      _
    $region7: #{tpu_custom_call.1} parent=1 // pred_check_branch
      %27 = sbr.rel (0) target = $region9
    $region8: #{tpu_custom_call.1} parent=1 // pred_region
      %s29 = ssub.s32 1152, 1152
      %30 = vsyncadd [#allocation6], %s29
      %s31 = sshll.u32 [#allocation5], 4
      %s32 = int_to_ptr.vmem [resolvable:$true] %s31
      %37 = dma.hbm_to_vmem [thread:$0]  %s1, 1152, %s32, [#allocation6], 384, 384, 24
    $region9: #{tpu_custom_call.1} parent=1 // pred_fallthru
      _
    // Predicated region
    $region10: #{tpu_custom_call.1} parent=1 // pred_check
      _
    $region11: #{tpu_custom_call.1} parent=1 // pred_check_branch
      %39 = sbr.rel (0) target = $region13
    $region12: #{tpu_custom_call.1} parent=1 // pred_region
      _
    $region13: #{tpu_custom_call.1} parent=1 // pred_fallthru
      _
    // Predicated region
    $region14: #{tpu_custom_call.1} parent=1 // pred_check
      _
    $region15: #{tpu_custom_call.1} parent=1 // pred_check_branch
      %41 = sbr.rel (0) target = $region17
    $region16: #{tpu_custom_call.1} parent=1 // pred_region
      %s43 = ssub.s32 6144, 6144
      %44 = vsyncadd [#allocation6], %s43
      %s45 = sshll.u32 [#allocation7], 4
      %s46 = int_to_ptr.vmem [resolvable:$true] %s45
      %51 = dma.hbm_to_vmem [thread:$0]  %s3, 6144, %s46, [#allocation6], 128, 128, 8
    $region17: #{tpu_custom_call.1} parent=1 // pred_fallthru
      _
    // Predicated region
    $region18: #{tpu_custom_call.1} parent=1 // pred_check
      _
    $region19: #{tpu_custom_call.1} parent=1 // pred_check_branch
      %53 = sbr.rel (0) target = $region21
    $region20: #{tpu_custom_call.1} parent=1 // pred_region
      _
    $region21: #{tpu_custom_call.1} parent=1 // pred_fallthru
      _
    // Predicated region
    $region22: #{tpu_custom_call.1} parent=1 // pred_check
      _
    $region23: #{tpu_custom_call.1} parent=1 // pred_check_branch
      %55 = sbr.rel (0) target = $region25
    $region24: #{tpu_custom_call.1} parent=1 // pred_region
      %s57 = ssub.s32 6144, 6144
      %58 = vsyncadd [#allocation9], %s57
      %s59 = sshll.u32 [#allocation8], 4
      %s60 = int_to_ptr.vmem [resolvable:$true] %s59
      %65 = dma.hbm_to_vmem [thread:$0]  %s5, 6144, %s60, [#allocation9], 128, 128, 8
    $region25: #{tpu_custom_call.1} parent=1 // pred_fallthru
      _
    // Predicated region
    $region26: #{tpu_custom_call.1} parent=1 // pred_check
      _
    $region27: #{tpu_custom_call.1} parent=1 // pred_check_branch
      %67 = sbr.rel (0) target = $region29
    $region28: #{tpu_custom_call.1} parent=1 // pred_region
      _
    $region29: #{tpu_custom_call.1} parent=1 // pred_fallthru
      _
    // Predicated region
    $region30: #{tpu_custom_call.1} parent=1 // pred_check
      _
    $region31: #{tpu_custom_call.1} parent=1 // pred_check_branch
      %69 = sbr.rel (0) target = $region33
    $region32: #{tpu_custom_call.1} parent=1 // pred_region
      %70 = dma.done [#allocation3], 128
    $region33: #{tpu_custom_call.1} parent=1 // pred_fallthru
      _
    // Predicated region
    $region34: #{tpu_custom_call.1} parent=1 // pred_check
      _
    $region35: #{tpu_custom_call.1} parent=1 // pred_check_branch
      %72 = sbr.rel (0) target = $region37
    $region36: #{tpu_custom_call.1} parent=1 // pred_region
      %73 = dma.done [#allocation6], 1152
    $region37: #{tpu_custom_call.1} parent=1 // pred_fallthru
      _
    // Predicated region
    $region38: #{tpu_custom_call.1} parent=1 // pred_check
      _
    $region39: #{tpu_custom_call.1} parent=1 // pred_check_branch
      %75 = sbr.rel (0) target = $region41
    $region40: #{tpu_custom_call.1} parent=1 // pred_region
      %76 = dma.done [#allocation6], 6144
    $region41: #{tpu_custom_call.1} parent=1 // pred_fallthru
      _
    // Predicated region
    $region42: #{tpu_custom_call.1} parent=1 // pred_check
      _
    $region43: #{tpu_custom_call.1} parent=1 // pred_check_branch
      %78 = sbr.rel (0) target = $region45
    $region44: #{tpu_custom_call.1} parent=1 // pred_region
      %79 = dma.done [#allocation9], 6144
    $region45: #{tpu_custom_call.1} parent=1 // pred_fallthru
      _
    %v80 = vld [vmem:[#allocation2] sm:$0xff]
    %v81 = vld [vmem:[#allocation5] sm:$0xff]
    %v82 = vld [vmem:[#allocation5 + $0x8] sm:$0xff]
    %v83 = vld [vmem:[#allocation5 + $0x10] sm:$0xff]
    %v84 = vld [vmem:[#allocation5 + $0x18] sm:$0xff]
    %v85 = vld [vmem:[#allocation5 + $0x20] sm:$0xff]
    %v86 = vld [vmem:[#allocation5 + $0x28] sm:$0xff]
    %v87 = vld [vmem:[#allocation5 + $0x30] sm:$0xff]
    %v88 = vld [vmem:[#allocation5 + $0x38] sm:$0xff]
    %v89 = vld [vmem:[#allocation5 + $0x40] sm:$0xff]
    %v90 = vld [vmem:[%s2] sm:$0x7]
    %v92 = vlaneseq
    %v93 = vshrl.u32 %v92, 7
    %v94 = vsub.s32 0, %v93
    %v95 = vrot.slane %v90, %v94
    %v96 = vlaneseq
    %v97 = vshrl.u32 %v96, 7
    %v98 = vsub.s32 1, %v97
    %v99 = vrot.slane %v90, %v98
    %v100 = vlaneseq
    %v101 = vshrl.u32 %v100, 7
    %v102 = vsub.s32 2, %v101
    %v103 = vrot.slane %v90, %v102
    %vm107 = vcmask 195584
    %v109 = vsel %vm107, %v80, 0
    %111 = vmatprep.subr.mxu0 %v82
    %112 = vmatpush1.msra.mxu0 %v81
    %113 = vmatprep.subr.mxu0 %v85
    %114 = vmatpush1.msra.mxu0 %v84
    %115 = vmatprep.subr.mxu0 %v88
    %116 = vmatpush1.msra.mxu0 %v87
    %117 = vmatprep.subr.mxu0 0.0
    %118 = vmatpush1.msra.mxu0 0.0
    %119 = vmatprep.subr.mxu0 0.0
    %120 = vmatpush1.msra.mxu0 0.0
    %121 = vmatprep.subr.mxu0 0.0
    %122 = vmatpush1.msra.mxu0 0.0
    %123 = vmatprep.subr.mxu0 0.0
    %124 = vmatpush1.msra.mxu0 0.0
    %125 = vmatprep.subr.mxu0 0.0
    %126 = vmatpush1.msra.mxu0 0.0
    %127 = vmatprep.subr.mxu0 0.0
    %128 = vmatpush1.msra.mxu0 0.0
    %129 = vmatprep.subr.mxu0 0.0
    %130 = vmatpush1.msra.mxu0 0.0
    %131 = vmatprep.subr.mxu0 0.0
    %132 = vmatpush1.msra.mxu0 0.0
    %133 = vmatprep.subr.mxu0 0.0
    %134 = vmatpush1.msra.mxu0 0.0
    %135 = vmatprep.subr.mxu0 0.0
    %136 = vmatpush1.msra.mxu0 0.0
    %137 = vmatprep.subr.mxu0 0.0
    %138 = vmatpush1.msra.mxu0 0.0
    %139 = vmatprep.subr.mxu0 0.0
    %140 = vmatpush1.msra.mxu0 0.0
    %141 = vmatprep.subr.mxu0 0.0
    %142 = vmatpush1.msra.mxu0 0.0
    %143 = vmatprep.subr.mxu0 0.0
    %144 = vmatpush1.msra.mxu0 0.0
    %145 = vmatprep.subr.mxu0 0.0
    %146 = vmatpush1.msra.mxu0 0.0
    %147 = vmatprep.subr.mxu0 0.0
    %148 = vmatpush1.msra.mxu0 0.0
    %149 = vmatprep.subr.mxu0 0.0
    %150 = vmatpush1.msra.mxu0 0.0
    %151 = vmatprep.subr.mxu0 0.0
    %152 = vmatpush1.msra.mxu0 0.0
    %153 = vmatprep.subr.mxu0 0.0
    %154 = vmatpush1.msra.mxu0 0.0
    %155 = vmatprep.subr.mxu0 0.0
    %156 = vmatpush1.msra.mxu0 0.0
    %157 = vmatprep.subr.mxu0 0.0
    %158 = vmatpush1.msra.mxu0 0.0
    %159 = vmatprep.subr.mxu0 0.0
    %160 = vmatpush1.msra.mxu0 0.0
    %161 = vmatprep.subr.mxu0 0.0
    %162 = vmatpush1.msra.mxu0 0.0
    %163 = vmatprep.subr.mxu0 0.0
    %164 = vmatpush1.msra.mxu0 0.0
    %165 = vmatprep.subr.mxu0 0.0
    %166 = vmatpush1.msra.mxu0 0.0
    %167 = vmatprep.subr.mxu0 0.0
    %168 = vmatpush1.msra.mxu0 0.0
    %169 = vmatprep.subr.mxu0 0.0
    %170 = vmatpush1.msra.mxu0 0.0
    %171 = vmatprep.subr.mxu0 0.0
    %172 = vmatpush1.msra.mxu0 0.0
    %173 = vmatprep.subr.mxu0 0.0
    %174 = vmatpush1.msra.mxu0 0.0
    %175 = vmatprep.mubr.f32.mxu0 0.0
    %176 = vmatmul.mubr.f32.gmra.mrb[0].mxu0 %v109
    %v177 = vpop.f32.mrb[0].mxu0
    %v178 = vadd.f32 %v95, %v177
    %v179 = vpop.f32.mrb[0].mxu0
    %v180 = vadd.f32 %v99, %v179
    %181 = vdwg.mxu0
    %182 = vmatprep.subr.mxu0 0.0
    %183 = vmatpush1.msra.mxu0 %v83
    %184 = vmatprep.subr.mxu0 0.0
    %185 = vmatpush1.msra.mxu0 %v86
    %186 = vmatprep.subr.mxu0 0.0
    %187 = vmatpush1.msra.mxu0 %v89
    %188 = vmatprep.subr.mxu0 0.0
    %189 = vmatpush1.msra.mxu0 0.0
    %190 = vmatprep.subr.mxu0 0.0
    %191 = vmatpush1.msra.mxu0 0.0
    %192 = vmatprep.subr.mxu0 0.0
    %193 = vmatpush1.msra.mxu0 0.0
    %194 = vmatprep.subr.mxu0 0.0
    %195 = vmatpush1.msra.mxu0 0.0
    %196 = vmatprep.subr.mxu0 0.0
    %197 = vmatpush1.msra.mxu0 0.0
    %198 = vmatprep.subr.mxu0 0.0
    %199 = vmatpush1.msra.mxu0 0.0
    %200 = vmatprep.subr.mxu0 0.0
    %201 = vmatpush1.msra.mxu0 0.0
    %202 = vmatprep.subr.mxu0 0.0
    %203 = vmatpush1.msra.mxu0 0.0
    %204 = vmatprep.subr.mxu0 0.0
    %205 = vmatpush1.msra.mxu0 0.0
    %206 = vmatprep.subr.mxu0 0.0
    %207 = vmatpush1.msra.mxu0 0.0
    %208 = vmatprep.subr.mxu0 0.0
    %209 = vmatpush1.msra.mxu0 0.0
    %210 = vmatprep.subr.mxu0 0.0
    %211 = vmatpush1.msra.mxu0 0.0
    %212 = vmatprep.subr.mxu0 0.0
    %213 = vmatpush1.msra.mxu0 0.0
    %214 = vmatprep.subr.mxu0 0.0
    %215 = vmatpush1.msra.mxu0 0.0
    %216 = vmatprep.subr.mxu0 0.0
    %217 = vmatpush1.msra.mxu0 0.0
    %218 = vmatprep.subr.mxu0 0.0
    %219 = vmatpush1.msra.mxu0 0.0
    %220 = vmatprep.subr.mxu0 0.0
    %221 = vmatpush1.msra.mxu0 0.0
    %222 = vmatprep.subr.mxu0 0.0
    %223 = vmatpush1.msra.mxu0 0.0
    %224 = vmatprep.subr.mxu0 0.0
    %225 = vmatpush1.msra.mxu0 0.0
    %226 = vmatprep.subr.mxu0 0.0
    %227 = vmatpush1.msra.mxu0 0.0
    %228 = vmatprep.subr.mxu0 0.0
    %229 = vmatpush1.msra.mxu0 0.0
    %230 = vmatprep.subr.mxu0 0.0
    %231 = vmatpush1.msra.mxu0 0.0
    %232 = vmatprep.subr.mxu0 0.0
    %233 = vmatpush1.msra.mxu0 0.0
    %234 = vmatprep.subr.mxu0 0.0
    %235 = vmatpush1.msra.mxu0 0.0
    %236 = vmatprep.subr.mxu0 0.0
    %237 = vmatpush1.msra.mxu0 0.0
    %238 = vmatprep.subr.mxu0 0.0
    %239 = vmatpush1.msra.mxu0 0.0
    %240 = vmatprep.subr.mxu0 0.0
    %241 = vmatpush1.msra.mxu0 0.0
    %242 = vmatprep.subr.mxu0 0.0
    %243 = vmatpush1.msra.mxu0 0.0
    %244 = vmatprep.subr.mxu0 0.0
    %245 = vmatpush1.msra.mxu0 0.0
    %246 = vmatprep.mubr.f32.mxu0 0.0
    %247 = vmatmul.mubr.f32.gmra.mrb[0].mxu0 %v109
    %v248 = vpop.f32.mrb[0].mxu0
    %v249 = vadd.f32 %v103, %v248
    %v250 = vpop.f32.mrb[0].mxu0
    %251 = vdwg.mxu0
    %v252 = vmul.f32 %v178, 0.1
    %v253 = vmul.f32 %v180, 0.1
    %v254 = vmul.f32 %v249, 0.1
    %v255 = vmax.f32 %v178, %v252
    %v256 = vmax.f32 %v180, %v253
    %v257 = vmax.f32 %v249, %v254
    %v258 = vld [vmem:[#allocation7] sm:$0xff]
    %v259 = vld [vmem:[#allocation7 + $0x8] sm:$0xff]
    %v260 = vld [vmem:[#allocation7 + $0x10] sm:$0xff]
    %v261 = vld [vmem:[#allocation7 + $0x18] sm:$0xff]
    %v262 = vld [vmem:[#allocation7 + $0x20] sm:$0xff]
    %v263 = vld [vmem:[#allocation7 + $0x28] sm:$0xff]
    %v264 = vld [vmem:[#allocation7 + $0x30] sm:$0xff]
    %v265 = vld [vmem:[#allocation7 + $0x38] sm:$0xff]
    %v266 = vld [vmem:[#allocation7 + $0x40] sm:$0xff]
    %v267 = vld [vmem:[#allocation7 + $0x48] sm:$0xff]
    %v268 = vld [vmem:[#allocation7 + $0x50] sm:$0xff]
    %v269 = vld [vmem:[#allocation7 + $0x58] sm:$0xff]
    %v270 = vld [vmem:[#allocation7 + $0x60] sm:$0xff]
    %v271 = vld [vmem:[#allocation7 + $0x68] sm:$0xff]
    %v272 = vld [vmem:[#allocation7 + $0x70] sm:$0xff]
    %v273 = vld [vmem:[#allocation7 + $0x78] sm:$0xff]
    %v274 = vld [vmem:[%s4] sm:$0x1]
    %v276 = vlaneseq
    %v277 = vshrl.u32 %v276, 7
    %v278 = vsub.s32 0, %v277
    %v279 = vrot.slane %v274, %v278
    %281 = vmatprep.subr.mxu0 0.0
    %282 = vmatpush1.msra.mxu0 %v258
    %283 = vmatprep.subr.mxu0 0.0
    %284 = vmatpush1.msra.mxu0 %v259
    %285 = vmatprep.subr.mxu0 0.0
    %286 = vmatpush1.msra.mxu0 %v260
    %287 = vmatprep.subr.mxu0 0.0
    %288 = vmatpush1.msra.mxu0 %v261
    %289 = vmatprep.subr.mxu0 0.0
    %290 = vmatpush1.msra.mxu0 %v262
    %291 = vmatprep.subr.mxu0 0.0
    %292 = vmatpush1.msra.mxu0 %v263
    %293 = vmatprep.subr.mxu0 0.0
    %294 = vmatpush1.msra.mxu0 %v264
    %295 = vmatprep.subr.mxu0 0.0
    %296 = vmatpush1.msra.mxu0 %v265
    %297 = vmatprep.subr.mxu0 0.0
    %298 = vmatpush1.msra.mxu0 %v266
    %299 = vmatprep.subr.mxu0 0.0
    %300 = vmatpush1.msra.mxu0 %v267
    %301 = vmatprep.subr.mxu0 0.0
    %302 = vmatpush1.msra.mxu0 %v268
    %303 = vmatprep.subr.mxu0 0.0
    %304 = vmatpush1.msra.mxu0 %v269
    %305 = vmatprep.subr.mxu0 0.0
    %306 = vmatpush1.msra.mxu0 %v270
    %307 = vmatprep.subr.mxu0 0.0
    %308 = vmatpush1.msra.mxu0 %v271
    %309 = vmatprep.subr.mxu0 0.0
    %310 = vmatpush1.msra.mxu0 %v272
    %311 = vmatprep.subr.mxu0 0.0
    %312 = vmatpush1.msra.mxu0 %v273
    %313 = vmatprep.subr.mxu0 0.0
    %314 = vmatpush1.msra.mxu0 0.0
    %315 = vmatprep.subr.mxu0 0.0
    %316 = vmatpush1.msra.mxu0 0.0
    %317 = vmatprep.subr.mxu0 0.0
    %318 = vmatpush1.msra.mxu0 0.0
    %319 = vmatprep.subr.mxu0 0.0
    %320 = vmatpush1.msra.mxu0 0.0
    %321 = vmatprep.subr.mxu0 0.0
    %322 = vmatpush1.msra.mxu0 0.0
    %323 = vmatprep.subr.mxu0 0.0
    %324 = vmatpush1.msra.mxu0 0.0
    %325 = vmatprep.subr.mxu0 0.0
    %326 = vmatpush1.msra.mxu0 0.0
    %327 = vmatprep.subr.mxu0 0.0
    %328 = vmatpush1.msra.mxu0 0.0
    %329 = vmatprep.subr.mxu0 0.0
    %330 = vmatpush1.msra.mxu0 0.0
    %331 = vmatprep.subr.mxu0 0.0
    %332 = vmatpush1.msra.mxu0 0.0
    %333 = vmatprep.subr.mxu0 0.0
    %334 = vmatpush1.msra.mxu0 0.0
    %335 = vmatprep.subr.mxu0 0.0
    %336 = vmatpush1.msra.mxu0 0.0
    %337 = vmatprep.subr.mxu0 0.0
    %338 = vmatpush1.msra.mxu0 0.0
    %339 = vmatprep.subr.mxu0 0.0
    %340 = vmatpush1.msra.mxu0 0.0
    %341 = vmatprep.subr.mxu0 0.0
    %342 = vmatpush1.msra.mxu0 0.0
    %343 = vmatprep.subr.mxu0 0.0
    %344 = vmatpush1.msra.mxu0 0.0
    %345 = vmatprep.mubr.f32.mxu0 0.0
    %346 = vmatmul.mubr.f32.gmra.mrb[0].mxu0 %v255
    %v347 = vpop.f32.mrb[0].mxu0
    %v348 = vadd.f32 %v279, %v347
    %v349 = vpop.f32.mrb[0].mxu0
    %350 = vdwg.mxu0
    %v351 = vmul.f32 %v348, 0.1
    %v352 = vmax.f32 %v348, %v351
    %v353 = vld [vmem:[#allocation8] sm:$0xff]
    %v354 = vld [vmem:[#allocation8 + $0x8] sm:$0xff]
    %v355 = vld [vmem:[#allocation8 + $0x10] sm:$0xff]
    %v356 = vld [vmem:[#allocation8 + $0x18] sm:$0xff]
    %v357 = vld [vmem:[#allocation8 + $0x20] sm:$0xff]
    %v358 = vld [vmem:[#allocation8 + $0x28] sm:$0xff]
    %v359 = vld [vmem:[#allocation8 + $0x30] sm:$0xff]
    %v360 = vld [vmem:[#allocation8 + $0x38] sm:$0xff]
    %v361 = vld [vmem:[#allocation8 + $0x40] sm:$0xff]
    %v362 = vld [vmem:[#allocation8 + $0x48] sm:$0xff]
    %v363 = vld [vmem:[#allocation8 + $0x50] sm:$0xff]
    %v364 = vld [vmem:[#allocation8 + $0x58] sm:$0xff]
    %v365 = vld [vmem:[#allocation8 + $0x60] sm:$0xff]
    %v366 = vld [vmem:[#allocation8 + $0x68] sm:$0xff]
    %v367 = vld [vmem:[#allocation8 + $0x70] sm:$0xff]
    %v368 = vld [vmem:[#allocation8 + $0x78] sm:$0xff]
    %v369 = vld [vmem:[%s6] sm:$0x1]
    %v371 = vlaneseq
    %v372 = vshrl.u32 %v371, 7
    %v373 = vsub.s32 0, %v372
    %v374 = vrot.slane %v369, %v373
    %376 = vmatprep.subr.mxu0 0.0
    %377 = vmatpush1.msra.mxu0 %v353
    %378 = vmatprep.subr.mxu0 0.0
    %379 = vmatpush1.msra.mxu0 %v354
    %380 = vmatprep.subr.mxu0 0.0
    %381 = vmatpush1.msra.mxu0 %v355
    %382 = vmatprep.subr.mxu0 0.0
    %383 = vmatpush1.msra.mxu0 %v356
    %384 = vmatprep.subr.mxu0 0.0
    %385 = vmatpush1.msra.mxu0 %v357
    %386 = vmatprep.subr.mxu0 0.0
    %387 = vmatpush1.msra.mxu0 %v358
    %388 = vmatprep.subr.mxu0 0.0
    %389 = vmatpush1.msra.mxu0 %v359
    %390 = vmatprep.subr.mxu0 0.0
    %391 = vmatpush1.msra.mxu0 %v360
    %392 = vmatprep.subr.mxu0 0.0
    %393 = vmatpush1.msra.mxu0 %v361
    %394 = vmatprep.subr.mxu0 0.0
    %395 = vmatpush1.msra.mxu0 %v362
    %396 = vmatprep.subr.mxu0 0.0
    %397 = vmatpush1.msra.mxu0 %v363
    %398 = vmatprep.subr.mxu0 0.0
    %399 = vmatpush1.msra.mxu0 %v364
    %400 = vmatprep.subr.mxu0 0.0
    %401 = vmatpush1.msra.mxu0 %v365
    %402 = vmatprep.subr.mxu0 0.0
    %403 = vmatpush1.msra.mxu0 %v366
    %404 = vmatprep.subr.mxu0 0.0
    %405 = vmatpush1.msra.mxu0 %v367
    %406 = vmatprep.subr.mxu0 0.0
    %407 = vmatpush1.msra.mxu0 %v368
    %408 = vmatprep.subr.mxu0 0.0
    %409 = vmatpush1.msra.mxu0 0.0
    %410 = vmatprep.subr.mxu0 0.0
    %411 = vmatpush1.msra.mxu0 0.0
    %412 = vmatprep.subr.mxu0 0.0
    %413 = vmatpush1.msra.mxu0 0.0
    %414 = vmatprep.subr.mxu0 0.0
    %415 = vmatpush1.msra.mxu0 0.0
    %416 = vmatprep.subr.mxu0 0.0
    %417 = vmatpush1.msra.mxu0 0.0
    %418 = vmatprep.subr.mxu0 0.0
    %419 = vmatpush1.msra.mxu0 0.0
    %420 = vmatprep.subr.mxu0 0.0
    %421 = vmatpush1.msra.mxu0 0.0
    %422 = vmatprep.subr.mxu0 0.0
    %423 = vmatpush1.msra.mxu0 0.0
    %424 = vmatprep.subr.mxu0 0.0
    %425 = vmatpush1.msra.mxu0 0.0
    %426 = vmatprep.subr.mxu0 0.0
    %427 = vmatpush1.msra.mxu0 0.0
    %428 = vmatprep.subr.mxu0 0.0
    %429 = vmatpush1.msra.mxu0 0.0
    %430 = vmatprep.subr.mxu0 0.0
    %431 = vmatpush1.msra.mxu0 0.0
    %432 = vmatprep.subr.mxu0 0.0
    %433 = vmatpush1.msra.mxu0 0.0
    %434 = vmatprep.subr.mxu0 0.0
    %435 = vmatpush1.msra.mxu0 0.0
    %436 = vmatprep.subr.mxu0 0.0
    %437 = vmatpush1.msra.mxu0 0.0
    %438 = vmatprep.subr.mxu0 0.0
    %439 = vmatpush1.msra.mxu0 0.0
    %440 = vmatprep.mubr.f32.mxu0 0.0
    %441 = vmatmul.mubr.f32.gmra.mrb[0].mxu0 %v352
    %v442 = vpop.f32.mrb[0].mxu0
    %v443 = vadd.f32 %v374, %v442
    %v444 = vpop.f32.mrb[0].mxu0
    %445 = vdwg.mxu0
    %446 = vst [vmem:[#allocation10] sm:$0xff] %v443
    %s447 = scalar_lea.vmem [#allocation7], 128
    %v448 = vld [vmem:[%s447] sm:$0xff]
    %v449 = vld [vmem:[%s447 + $0x8] sm:$0xff]
    %v450 = vld [vmem:[%s447 + $0x10] sm:$0xff]
    %v451 = vld [vmem:[%s447 + $0x18] sm:$0xff]
    %v452 = vld [vmem:[%s447 + $0x20] sm:$0xff]
    %v453 = vld [vmem:[%s447 + $0x28] sm:$0xff]
    %v454 = vld [vmem:[%s447 + $0x30] sm:$0xff]
    %v455 = vld [vmem:[%s447 + $0x38] sm:$0xff]
    %v456 = vld [vmem:[%s447 + $0x40] sm:$0xff]
    %v457 = vld [vmem:[%s447 + $0x48] sm:$0xff]
    %v458 = vld [vmem:[%s447 + $0x50] sm:$0xff]
    %v459 = vld [vmem:[%s447 + $0x58] sm:$0xff]
    %v460 = vld [vmem:[%s447 + $0x60] sm:$0xff]
    %v461 = vld [vmem:[%s447 + $0x68] sm:$0xff]
    %v462 = vld [vmem:[%s447 + $0x70] sm:$0xff]
    %v463 = vld [vmem:[%s447 + $0x78] sm:$0xff]
    %s464 = scalar_lea.vmem %s4, 1
    %v465 = vld [vmem:[%s464] sm:$0x1]
    %v467 = vlaneseq
    %v468 = vshrl.u32 %v467, 7
    %v469 = vsub.s32 0, %v468
    %v470 = vrot.slane %v465, %v469
    %472 = vmatprep.subr.mxu0 0.0
    %473 = vmatpush1.msra.mxu0 %v448
    %474 = vmatprep.subr.mxu0 0.0
    %475 = vmatpush1.msra.mxu0 %v449
    %476 = vmatprep.subr.mxu0 0.0
    %477 = vmatpush1.msra.mxu0 %v450
    %478 = vmatprep.subr.mxu0 0.0
    %479 = vmatpush1.msra.mxu0 %v451
    %480 = vmatprep.subr.mxu0 0.0
    %481 = vmatpush1.msra.mxu0 %v452
    %482 = vmatprep.subr.mxu0 0.0
    %483 = vmatpush1.msra.mxu0 %v453
    %484 = vmatprep.subr.mxu0 0.0
    %485 = vmatpush1.msra.mxu0 %v454
    %486 = vmatprep.subr.mxu0 0.0
    %487 = vmatpush1.msra.mxu0 %v455
    %488 = vmatprep.subr.mxu0 0.0
    %489 = vmatpush1.msra.mxu0 %v456
    %490 = vmatprep.subr.mxu0 0.0
    %491 = vmatpush1.msra.mxu0 %v457
    %492 = vmatprep.subr.mxu0 0.0
    %493 = vmatpush1.msra.mxu0 %v458
    %494 = vmatprep.subr.mxu0 0.0
    %495 = vmatpush1.msra.mxu0 %v459
    %496 = vmatprep.subr.mxu0 0.0
    %497 = vmatpush1.msra.mxu0 %v460
    %498 = vmatprep.subr.mxu0 0.0
    %499 = vmatpush1.msra.mxu0 %v461
    %500 = vmatprep.subr.mxu0 0.0
    %501 = vmatpush1.msra.mxu0 %v462
    %502 = vmatprep.subr.mxu0 0.0
    %503 = vmatpush1.msra.mxu0 %v463
    %504 = vmatprep.subr.mxu0 0.0
    %505 = vmatpush1.msra.mxu0 0.0
    %506 = vmatprep.subr.mxu0 0.0
    %507 = vmatpush1.msra.mxu0 0.0
    %508 = vmatprep.subr.mxu0 0.0
    %509 = vmatpush1.msra.mxu0 0.0
    %510 = vmatprep.subr.mxu0 0.0
    %511 = vmatpush1.msra.mxu0 0.0
    %512 = vmatprep.subr.mxu0 0.0
    %513 = vmatpush1.msra.mxu0 0.0
    %514 = vmatprep.subr.mxu0 0.0
    %515 = vmatpush1.msra.mxu0 0.0
    %516 = vmatprep.subr.mxu0 0.0
    %517 = vmatpush1.msra.mxu0 0.0
    %518 = vmatprep.subr.mxu0 0.0
    %519 = vmatpush1.msra.mxu0 0.0
    %520 = vmatprep.subr.mxu0 0.0
    %521 = vmatpush1.msra.mxu0 0.0
    %522 = vmatprep.subr.mxu0 0.0
    %523 = vmatpush1.msra.mxu0 0.0
    %524 = vmatprep.subr.mxu0 0.0
    %525 = vmatpush1.msra.mxu0 0.0
    %526 = vmatprep.subr.mxu0 0.0
    %527 = vmatpush1.msra.mxu0 0.0
    %528 = vmatprep.subr.mxu0 0.0
    %529 = vmatpush1.msra.mxu0 0.0
    %530 = vmatprep.subr.mxu0 0.0
    %531 = vmatpush1.msra.mxu0 0.0
    %532 = vmatprep.subr.mxu0 0.0
    %533 = vmatpush1.msra.mxu0 0.0
    %534 = vmatprep.subr.mxu0 0.0
    %535 = vmatpush1.msra.mxu0 0.0
    %536 = vmatprep.mubr.f32.mxu0 0.0
    %537 = vmatmul.mubr.f32.gmra.mrb[0].mxu0 %v256
    %v538 = vpop.f32.mrb[0].mxu0
    %v539 = vadd.f32 %v470, %v538
    %v540 = vpop.f32.mrb[0].mxu0
    %541 = vdwg.mxu0
    %v542 = vmul.f32 %v539, 0.1
    %v543 = vmax.f32 %v539, %v542
    %s544 = scalar_lea.vmem [#allocation8], 128
    %v545 = vld [vmem:[%s544] sm:$0xff]
    %v546 = vld [vmem:[%s544 + $0x8] sm:$0xff]
    %v547 = vld [vmem:[%s544 + $0x10] sm:$0xff]
    %v548 = vld [vmem:[%s544 + $0x18] sm:$0xff]
    %v549 = vld [vmem:[%s544 + $0x20] sm:$0xff]
    %v550 = vld [vmem:[%s544 + $0x28] sm:$0xff]
    %v551 = vld [vmem:[%s544 + $0x30] sm:$0xff]
    %v552 = vld [vmem:[%s544 + $0x38] sm:$0xff]
    %v553 = vld [vmem:[%s544 + $0x40] sm:$0xff]
    %v554 = vld [vmem:[%s544 + $0x48] sm:$0xff]
    %v555 = vld [vmem:[%s544 + $0x50] sm:$0xff]
    %v556 = vld [vmem:[%s544 + $0x58] sm:$0xff]
    %v557 = vld [vmem:[%s544 + $0x60] sm:$0xff]
    %v558 = vld [vmem:[%s544 + $0x68] sm:$0xff]
    %v559 = vld [vmem:[%s544 + $0x70] sm:$0xff]
    %v560 = vld [vmem:[%s544 + $0x78] sm:$0xff]
    %s561 = scalar_lea.vmem %s6, 1
    %v562 = vld [vmem:[%s561] sm:$0x1]
    %v564 = vlaneseq
    %v565 = vshrl.u32 %v564, 7
    %v566 = vsub.s32 0, %v565
    %v567 = vrot.slane %v562, %v566
    %569 = vmatprep.subr.mxu0 0.0
    %570 = vmatpush1.msra.mxu0 %v545
    %571 = vmatprep.subr.mxu0 0.0
    %572 = vmatpush1.msra.mxu0 %v546
    %573 = vmatprep.subr.mxu0 0.0
    %574 = vmatpush1.msra.mxu0 %v547
    %575 = vmatprep.subr.mxu0 0.0
    %576 = vmatpush1.msra.mxu0 %v548
    %577 = vmatprep.subr.mxu0 0.0
    %578 = vmatpush1.msra.mxu0 %v549
    %579 = vmatprep.subr.mxu0 0.0
    %580 = vmatpush1.msra.mxu0 %v550
    %581 = vmatprep.subr.mxu0 0.0
    %582 = vmatpush1.msra.mxu0 %v551
    %583 = vmatprep.subr.mxu0 0.0
    %584 = vmatpush1.msra.mxu0 %v552
    %585 = vmatprep.subr.mxu0 0.0
    %586 = vmatpush1.msra.mxu0 %v553
    %587 = vmatprep.subr.mxu0 0.0
    %588 = vmatpush1.msra.mxu0 %v554
    %589 = vmatprep.subr.mxu0 0.0
    %590 = vmatpush1.msra.mxu0 %v555
    %591 = vmatprep.subr.mxu0 0.0
    %592 = vmatpush1.msra.mxu0 %v556
    %593 = vmatprep.subr.mxu0 0.0
    %594 = vmatpush1.msra.mxu0 %v557
    %595 = vmatprep.subr.mxu0 0.0
    %596 = vmatpush1.msra.mxu0 %v558
    %597 = vmatprep.subr.mxu0 0.0
    %598 = vmatpush1.msra.mxu0 %v559
    %599 = vmatprep.subr.mxu0 0.0
    %600 = vmatpush1.msra.mxu0 %v560
    %601 = vmatprep.subr.mxu0 0.0
    %602 = vmatpush1.msra.mxu0 0.0
    %603 = vmatprep.subr.mxu0 0.0
    %604 = vmatpush1.msra.mxu0 0.0
    %605 = vmatprep.subr.mxu0 0.0
    %606 = vmatpush1.msra.mxu0 0.0
    %607 = vmatprep.subr.mxu0 0.0
    %608 = vmatpush1.msra.mxu0 0.0
    %609 = vmatprep.subr.mxu0 0.0
    %610 = vmatpush1.msra.mxu0 0.0
    %611 = vmatprep.subr.mxu0 0.0
    %612 = vmatpush1.msra.mxu0 0.0
    %613 = vmatprep.subr.mxu0 0.0
    %614 = vmatpush1.msra.mxu0 0.0
    %615 = vmatprep.subr.mxu0 0.0
    %616 = vmatpush1.msra.mxu0 0.0
    %617 = vmatprep.subr.mxu0 0.0
    %618 = vmatpush1.msra.mxu0 0.0
    %619 = vmatprep.subr.mxu0 0.0
    %620 = vmatpush1.msra.mxu0 0.0
    %621 = vmatprep.subr.mxu0 0.0
    %622 = vmatpush1.msra.mxu0 0.0
    %623 = vmatprep.subr.mxu0 0.0
    %624 = vmatpush1.msra.mxu0 0.0
    %625 = vmatprep.subr.mxu0 0.0
    %626 = vmatpush1.msra.mxu0 0.0
    %627 = vmatprep.subr.mxu0 0.0
    %628 = vmatpush1.msra.mxu0 0.0
    %629 = vmatprep.subr.mxu0 0.0
    %630 = vmatpush1.msra.mxu0 0.0
    %631 = vmatprep.subr.mxu0 0.0
    %632 = vmatpush1.msra.mxu0 0.0
    %633 = vmatprep.mubr.f32.mxu0 0.0
    %634 = vmatmul.mubr.f32.gmra.mrb[0].mxu0 %v543
    %v635 = vpop.f32.mrb[0].mxu0
    %v636 = vadd.f32 %v567, %v635
    %v637 = vpop.f32.mrb[0].mxu0
    %638 = vdwg.mxu0
    %639 = vst [vmem:[#allocation10 + $0x8] sm:$0xff] %v636
    %s640 = scalar_lea.vmem [#allocation7], 256
    %v641 = vld [vmem:[%s640] sm:$0xff]
    %v642 = vld [vmem:[%s640 + $0x8] sm:$0xff]
    %v643 = vld [vmem:[%s640 + $0x10] sm:$0xff]
    %v644 = vld [vmem:[%s640 + $0x18] sm:$0xff]
    %v645 = vld [vmem:[%s640 + $0x20] sm:$0xff]
    %v646 = vld [vmem:[%s640 + $0x28] sm:$0xff]
    %v647 = vld [vmem:[%s640 + $0x30] sm:$0xff]
    %v648 = vld [vmem:[%s640 + $0x38] sm:$0xff]
    %v649 = vld [vmem:[%s640 + $0x40] sm:$0xff]
    %v650 = vld [vmem:[%s640 + $0x48] sm:$0xff]
    %v651 = vld [vmem:[%s640 + $0x50] sm:$0xff]
    %v652 = vld [vmem:[%s640 + $0x58] sm:$0xff]
    %v653 = vld [vmem:[%s640 + $0x60] sm:$0xff]
    %v654 = vld [vmem:[%s640 + $0x68] sm:$0xff]
    %v655 = vld [vmem:[%s640 + $0x70] sm:$0xff]
    %v656 = vld [vmem:[%s640 + $0x78] sm:$0xff]
    %s657 = scalar_lea.vmem %s4, 2
    %v658 = vld [vmem:[%s657] sm:$0x1]
    %v660 = vlaneseq
    %v661 = vshrl.u32 %v660, 7
    %v662 = vsub.s32 0, %v661
    %v663 = vrot.slane %v658, %v662
    %665 = vmatprep.subr.mxu0 0.0
    %666 = vmatpush1.msra.mxu0 %v641
    %667 = vmatprep.subr.mxu0 0.0
    %668 = vmatpush1.msra.mxu0 %v642
    %669 = vmatprep.subr.mxu0 0.0
    %670 = vmatpush1.msra.mxu0 %v643
    %671 = vmatprep.subr.mxu0 0.0
    %672 = vmatpush1.msra.mxu0 %v644
    %673 = vmatprep.subr.mxu0 0.0
    %674 = vmatpush1.msra.mxu0 %v645
    %675 = vmatprep.subr.mxu0 0.0
    %676 = vmatpush1.msra.mxu0 %v646
    %677 = vmatprep.subr.mxu0 0.0
    %678 = vmatpush1.msra.mxu0 %v647
    %679 = vmatprep.subr.mxu0 0.0
    %680 = vmatpush1.msra.mxu0 %v648
    %681 = vmatprep.subr.mxu0 0.0
    %682 = vmatpush1.msra.mxu0 %v649
    %683 = vmatprep.subr.mxu0 0.0
    %684 = vmatpush1.msra.mxu0 %v650
    %685 = vmatprep.subr.mxu0 0.0
    %686 = vmatpush1.msra.mxu0 %v651
    %687 = vmatprep.subr.mxu0 0.0
    %688 = vmatpush1.msra.mxu0 %v652
    %689 = vmatprep.subr.mxu0 0.0
    %690 = vmatpush1.msra.mxu0 %v653
    %691 = vmatprep.subr.mxu0 0.0
    %692 = vmatpush1.msra.mxu0 %v654
    %693 = vmatprep.subr.mxu0 0.0
    %694 = vmatpush1.msra.mxu0 %v655
    %695 = vmatprep.subr.mxu0 0.0
    %696 = vmatpush1.msra.mxu0 %v656
    %697 = vmatprep.subr.mxu0 0.0
    %698 = vmatpush1.msra.mxu0 0.0
    %699 = vmatprep.subr.mxu0 0.0
    %700 = vmatpush1.msra.mxu0 0.0
    %701 = vmatprep.subr.mxu0 0.0
    %702 = vmatpush1.msra.mxu0 0.0
    %703 = vmatprep.subr.mxu0 0.0
    %704 = vmatpush1.msra.mxu0 0.0
    %705 = vmatprep.subr.mxu0 0.0
    %706 = vmatpush1.msra.mxu0 0.0
    %707 = vmatprep.subr.mxu0 0.0
    %708 = vmatpush1.msra.mxu0 0.0
    %709 = vmatprep.subr.mxu0 0.0
    %710 = vmatpush1.msra.mxu0 0.0
    %711 = vmatprep.subr.mxu0 0.0
    %712 = vmatpush1.msra.mxu0 0.0
    %713 = vmatprep.subr.mxu0 0.0
    %714 = vmatpush1.msra.mxu0 0.0
    %715 = vmatprep.subr.mxu0 0.0
    %716 = vmatpush1.msra.mxu0 0.0
    %717 = vmatprep.subr.mxu0 0.0
    %718 = vmatpush1.msra.mxu0 0.0
    %719 = vmatprep.subr.mxu0 0.0
    %720 = vmatpush1.msra.mxu0 0.0
    %721 = vmatprep.subr.mxu0 0.0
    %722 = vmatpush1.msra.mxu0 0.0
    %723 = vmatprep.subr.mxu0 0.0
    %724 = vmatpush1.msra.mxu0 0.0
    %725 = vmatprep.subr.mxu0 0.0
    %726 = vmatpush1.msra.mxu0 0.0
    %727 = vmatprep.subr.mxu0 0.0
    %728 = vmatpush1.msra.mxu0 0.0
    %729 = vmatprep.mubr.f32.mxu0 0.0
    %730 = vmatmul.mubr.f32.gmra.mrb[0].mxu0 %v257
    %v731 = vpop.f32.mrb[0].mxu0
    %v732 = vadd.f32 %v663, %v731
    %v733 = vpop.f32.mrb[0].mxu0
    %734 = vdwg.mxu0
    %v735 = vmul.f32 %v732, 0.1
    %v736 = vmax.f32 %v732, %v735
    %s737 = scalar_lea.vmem [#allocation8], 256
    %v738 = vld [vmem:[%s737] sm:$0xff]
    %v739 = vld [vmem:[%s737 + $0x8] sm:$0xff]
    %v740 = vld [vmem:[%s737 + $0x10] sm:$0xff]
    %v741 = vld [vmem:[%s737 + $0x18] sm:$0xff]
    %v742 = vld [vmem:[%s737 + $0x20] sm:$0xff]
    %v743 = vld [vmem:[%s737 + $0x28] sm:$0xff]
    %v744 = vld [vmem:[%s737 + $0x30] sm:$0xff]
    %v745 = vld [vmem:[%s737 + $0x38] sm:$0xff]
    %v746 = vld [vmem:[%s737 + $0x40] sm:$0xff]
    %v747 = vld [vmem:[%s737 + $0x48] sm:$0xff]
    %v748 = vld [vmem:[%s737 + $0x50] sm:$0xff]
    %v749 = vld [vmem:[%s737 + $0x58] sm:$0xff]
    %v750 = vld [vmem:[%s737 + $0x60] sm:$0xff]
    %v751 = vld [vmem:[%s737 + $0x68] sm:$0xff]
    %v752 = vld [vmem:[%s737 + $0x70] sm:$0xff]
    %v753 = vld [vmem:[%s737 + $0x78] sm:$0xff]
    %s754 = scalar_lea.vmem %s6, 2
    %v755 = vld [vmem:[%s754] sm:$0x1]
    %v757 = vlaneseq
    %v758 = vshrl.u32 %v757, 7
    %v759 = vsub.s32 0, %v758
    %v760 = vrot.slane %v755, %v759
    %762 = vmatprep.subr.mxu0 0.0
    %763 = vmatpush1.msra.mxu0 %v738
    %764 = vmatprep.subr.mxu0 0.0
    %765 = vmatpush1.msra.mxu0 %v739
    %766 = vmatprep.subr.mxu0 0.0
    %767 = vmatpush1.msra.mxu0 %v740
    %768 = vmatprep.subr.mxu0 0.0
    %769 = vmatpush1.msra.mxu0 %v741
    %770 = vmatprep.subr.mxu0 0.0
    %771 = vmatpush1.msra.mxu0 %v742
    %772 = vmatprep.subr.mxu0 0.0
    %773 = vmatpush1.msra.mxu0 %v743
    %774 = vmatprep.subr.mxu0 0.0
    %775 = vmatpush1.msra.mxu0 %v744
    %776 = vmatprep.subr.mxu0 0.0
    %777 = vmatpush1.msra.mxu0 %v745
    %778 = vmatprep.subr.mxu0 0.0
    %779 = vmatpush1.msra.mxu0 %v746
    %780 = vmatprep.subr.mxu0 0.0
    %781 = vmatpush1.msra.mxu0 %v747
    %782 = vmatprep.subr.mxu0 0.0
    %783 = vmatpush1.msra.mxu0 %v748
    %784 = vmatprep.subr.mxu0 0.0
    %785 = vmatpush1.msra.mxu0 %v749
    %786 = vmatprep.subr.mxu0 0.0
    %787 = vmatpush1.msra.mxu0 %v750
    %788 = vmatprep.subr.mxu0 0.0
    %789 = vmatpush1.msra.mxu0 %v751
    %790 = vmatprep.subr.mxu0 0.0
    %791 = vmatpush1.msra.mxu0 %v752
    %792 = vmatprep.subr.mxu0 0.0
    %793 = vmatpush1.msra.mxu0 %v753
    %794 = vmatprep.subr.mxu0 0.0
    %795 = vmatpush1.msra.mxu0 0.0
    %796 = vmatprep.subr.mxu0 0.0
    %797 = vmatpush1.msra.mxu0 0.0
    %798 = vmatprep.subr.mxu0 0.0
    %799 = vmatpush1.msra.mxu0 0.0
    %800 = vmatprep.subr.mxu0 0.0
    %801 = vmatpush1.msra.mxu0 0.0
    %802 = vmatprep.subr.mxu0 0.0
    %803 = vmatpush1.msra.mxu0 0.0
    %804 = vmatprep.subr.mxu0 0.0
    %805 = vmatpush1.msra.mxu0 0.0
    %806 = vmatprep.subr.mxu0 0.0
    %807 = vmatpush1.msra.mxu0 0.0
    %808 = vmatprep.subr.mxu0 0.0
    %809 = vmatpush1.msra.mxu0 0.0
    %810 = vmatprep.subr.mxu0 0.0
    %811 = vmatpush1.msra.mxu0 0.0
    %812 = vmatprep.subr.mxu0 0.0
    %813 = vmatpush1.msra.mxu0 0.0
    %814 = vmatprep.subr.mxu0 0.0
    %815 = vmatpush1.msra.mxu0 0.0
    %816 = vmatprep.subr.mxu0 0.0
    %817 = vmatpush1.msra.mxu0 0.0
    %818 = vmatprep.subr.mxu0 0.0
    %819 = vmatpush1.msra.mxu0 0.0
    %820 = vmatprep.subr.mxu0 0.0
    %821 = vmatpush1.msra.mxu0 0.0
    %822 = vmatprep.subr.mxu0 0.0
    %823 = vmatpush1.msra.mxu0 0.0
    %824 = vmatprep.subr.mxu0 0.0
    %825 = vmatpush1.msra.mxu0 0.0
    %826 = vmatprep.mubr.f32.mxu0 0.0
    %827 = vmatmul.mubr.f32.gmra.mrb[0].mxu0 %v736
    %v828 = vpop.f32.mrb[0].mxu0
    %v829 = vadd.f32 %v760, %v828
    %v830 = vpop.f32.mrb[0].mxu0
    %831 = vdwg.mxu0
    %832 = vst [vmem:[#allocation10 + $0x10] sm:$0xff] %v829
    // Predicated region
    $region46: #{tpu_custom_call.1} parent=1 // pred_check
      _
    $region47: #{tpu_custom_call.1} parent=1 // pred_check_branch
      %834 = sbr.rel (0) target = $region49
    $region48: #{tpu_custom_call.1} parent=1 // pred_region
      %s836 = ssub.s32 384, 384
      %837 = vsyncadd [#allocation4], %s836
      %s839 = sshll.u32 [#allocation10], 4
      %s840 = int_to_ptr.vmem [resolvable:$true] %s839
      %842 = dma.vmem_to_hbm [thread:$0]  %s840, 384, %s7, [#allocation4]
    $region49: #{tpu_custom_call.1} parent=1 // pred_fallthru
      _
    // Predicated region
    $region50: #{tpu_custom_call.1} parent=1 // pred_check
      _
    $region51: #{tpu_custom_call.1} parent=1 // pred_check_branch
      %844 = sbr.rel (0) target = $region53
    $region52: #{tpu_custom_call.1} parent=1 // pred_region
      %845 = dma.done [#allocation4], 384
    $region53: #{tpu_custom_call.1} parent=1 // pred_fallthru
      _
    %846 = vsyncpa [#allocation3], 1
    %847 = vsyncpa [#allocation6], 1
    %848 = vsyncpa [#allocation9], 1
    %849 = vsyncpa [#allocation4], 1

// kernel: tpu_custom_call.1
$region0: #{tpu_custom_call.1}
  #allocation0 [shape = 'u32[]', space=smem, size = 0x4, offset = 0x4, fixed_abs, tag = 'smem constant byte address 0x4 - core index']
  #allocation1 [shape = 'u32[144,128]{1,0:T(1,128)}', space=vmem, size = 0x12000, scoped, tag = 'internal scratch']
  %s0 = inlined_call_operand.hbm [shape: f32[8,24], index: 0, kind: input, shape index: {}]
  %s1 = inlined_call_operand.hbm [shape: f32[24,384], index: 1, kind: input, shape index: {}]
  %s2 = inlined_call_operand.vmem [shape: f32[1,384], index: 2, kind: input, shape index: {}]
  %s3 = inlined_call_operand.hbm [shape: f32[3,128,128], index: 3, kind: input, shape index: {}]
  %s4 = inlined_call_operand.vmem [shape: f32[3,1,128], index: 4, kind: input, shape index: {}]
  %s5 = inlined_call_operand.hbm [shape: f32[3,128,128], index: 5, kind: input, shape index: {}]
  %s6 = inlined_call_operand.vmem [shape: f32[3,1,128], index: 6, kind: input, shape index: {}]
  %s7 = inlined_call_operand.hbm [shape: f32[8,384], index: 7, kind: output, shape index: {}]
  %s8 = sld [smem:[#allocation0]]
  $region54: #{tpu_custom_call.1} parent=0
    _
  %s10 = ssub.s32 1, %s8
  %s11 = scalar_select 0, %s10, %s8
  $region1: #{tpu_custom_call.1} parent=0
    #allocation2 [shape = 'u8[4096]{0}', space=vmem, size = 0x1000, scoped, tag = 'input window, operand 0, single buffered']
    #allocation3 [shape = 's32[1]{0}', space=sflag, size = 0x4, scoped, tag = 'scoped memory for tpu_custom_call.1']
    #allocation4 [shape = 's32[1]{0}', space=sflag, size = 0x4, scoped, tag = 'scoped memory for tpu_custom_call.1']
    #allocation5 [shape = 'u8[36864]{0}', space=vmem, size = 0x9000, scoped, tag = 'input window, operand 1, single buffered']
    #allocation6 [shape = 's32[1]{0}', space=sflag, size = 0x4, scoped, tag = 'scoped memory for tpu_custom_call.1']
    #allocation7 [shape = 'u8[196608]{0}', space=vmem, size = 0x30000, scoped, tag = 'input window, operand 3, single buffered']
    #allocation8 [shape = 'u8[196608]{0}', space=vmem, size = 0x30000, scoped, tag = 'input window, operand 5, single buffered']
    #allocation9 [shape = 's32[1]{0}', space=sflag, size = 0x4, scoped, tag = 'scoped memory for tpu_custom_call.1']
    #allocation10 [shape = 'u8[12288]{0}', space=vmem, size = 0x3000, scoped, tag = 'output window, operand 0, single buffered']
    %12 = vsyncpa [#allocation3], 0
    %13 = vsyncpa [#allocation6], 0
    %14 = vsyncpa [#allocation9], 0
    %15 = vsyncpa [#allocation4], 0
    // Predicated region
    $region2: #{tpu_custom_call.1} parent=1 // pred_check
      _
    $region3: #{tpu_custom_call.1} parent=1 // pred_check_branch
      %17 = sbr.rel (0) target = $region5
    $region4: #{tpu_custom_call.1} parent=1 // pred_region
      %s19 = ssub.s32 128, 128
      %20 = vsyncadd [#allocation3], %s19
      %s22 = sshll.u32 [#allocation2], 4
      %s23 = int_to_ptr.vmem [resolvable:$true] %s22
      %25 = dma.hbm_to_vmem [thread:$0]  %s0, 128, %s23, [#allocation3]
    $region5: #{tpu_custom_call.1} parent=1 // pred_fallthru
      _
    // Predicated region
    $region6: #{tpu_custom_call.1} parent=1 // pred_check
      _
    $region7: #{tpu_custom_call.1} parent=1 // pred_check_branch
      %27 = sbr.rel (0) target = $region9
    $region8: #{tpu_custom_call.1} parent=1 // pred_region
      %s29 = ssub.s32 1152, 1152
      %30 = vsyncadd [#allocation6], %s29
      %s31 = sshll.u32 [#allocation5], 4
      %s32 = int_to_ptr.vmem [resolvable:$true] %s31
      %37 = dma.hbm_to_vmem [thread:$0]  %s1, 1152, %s32, [#allocation6], 384, 384, 24
    $region9: #{tpu_custom_call.1} parent=1 // pred_fallthru
      _
    // Predicated region
    $region10: #{tpu_custom_call.1} parent=1 // pred_check
      _
    $region11: #{tpu_custom_call.1} parent=1 // pred_check_branch
      %39 = sbr.rel (0) target = $region13
    $region12: #{tpu_custom_call.1} parent=1 // pred_region
      _
    $region13: #{tpu_custom_call.1} parent=1 // pred_fallthru
      _
    // Predicated region
    $region14: #{tpu_custom_call.1} parent=1 // pred_check
      _
    $region15: #{tpu_custom_call.1} parent=1 // pred_check_branch
      %41 = sbr.rel (0) target = $region17
    $region16: #{tpu_custom_call.1} parent=1 // pred_region
      %s43 = ssub.s32 6144, 6144
      %44 = vsyncadd [#allocation6], %s43
      %s45 = sshll.u32 [#allocation7], 4
      %s46 = int_to_ptr.vmem [resolvable:$true] %s45
      %51 = dma.hbm_to_vmem [thread:$0]  %s3, 6144, %s46, [#allocation6], 128, 128, 8
    $region17: #{tpu_custom_call.1} parent=1 // pred_fallthru
      _
    // Predicated region
    $region18: #{tpu_custom_call.1} parent=1 // pred_check
      _
    $region19: #{tpu_custom_call.1} parent=1 // pred_check_branch
      %53 = sbr.rel (0) target = $region21
    $region20: #{tpu_custom_call.1} parent=1 // pred_region
      _
    $region21: #{tpu_custom_call.1} parent=1 // pred_fallthru
      _
    // Predicated region
    $region22: #{tpu_custom_call.1} parent=1 // pred_check
      _
    $region23: #{tpu_custom_call.1} parent=1 // pred_check_branch
      %55 = sbr.rel (0) target = $region25
    $region24: #{tpu_custom_call.1} parent=1 // pred_region
      %s57 = ssub.s32 6144, 6144
      %58 = vsyncadd [#allocation9], %s57
      %s59 = sshll.u32 [#allocation8], 4
      %s60 = int_to_ptr.vmem [resolvable:$true] %s59
      %65 = dma.hbm_to_vmem [thread:$0]  %s5, 6144, %s60, [#allocation9], 128, 128, 8
    $region25: #{tpu_custom_call.1} parent=1 // pred_fallthru
      _
    // Predicated region
    $region26: #{tpu_custom_call.1} parent=1 // pred_check
      _
    $region27: #{tpu_custom_call.1} parent=1 // pred_check_branch
      %67 = sbr.rel (0) target = $region29
    $region28: #{tpu_custom_call.1} parent=1 // pred_region
      _
    $region29: #{tpu_custom_call.1} parent=1 // pred_fallthru
      _
    // Predicated region
    $region30: #{tpu_custom_call.1} parent=1 // pred_check
      _
    $region31: #{tpu_custom_call.1} parent=1 // pred_check_branch
      %69 = sbr.rel (0) target = $region33
    $region32: #{tpu_custom_call.1} parent=1 // pred_region
      %70 = dma.done [#allocation3], 128
    $region33: #{tpu_custom_call.1} parent=1 // pred_fallthru
      _
    // Predicated region
    $region34: #{tpu_custom_call.1} parent=1 // pred_check
      _
    $region35: #{tpu_custom_call.1} parent=1 // pred_check_branch
      %72 = sbr.rel (0) target = $region37
    $region36: #{tpu_custom_call.1} parent=1 // pred_region
      %73 = dma.done [#allocation6], 1152
    $region37: #{tpu_custom_call.1} parent=1 // pred_fallthru
      _
    // Predicated region
    $region38: #{tpu_custom_call.1} parent=1 // pred_check
      _
    $region39: #{tpu_custom_call.1} parent=1 // pred_check_branch
      %75 = sbr.rel (0) target = $region41
    $region40: #{tpu_custom_call.1} parent=1 // pred_region
      %76 = dma.done [#allocation6], 6144
    $region41: #{tpu_custom_call.1} parent=1 // pred_fallthru
      _
    // Predicated region
    $region42: #{tpu_custom_call.1} parent=1 // pred_check
      _
    $region43: #{tpu_custom_call.1} parent=1 // pred_check_branch
      %78 = sbr.rel (0) target = $region45
    $region44: #{tpu_custom_call.1} parent=1 // pred_region
      %79 = dma.done [#allocation9], 6144
    $region45: #{tpu_custom_call.1} parent=1 // pred_fallthru
      _
    %v80 = vld [vmem:[#allocation2] sm:$0xff]
    %v81 = vld [vmem:[#allocation5] sm:$0xff]
    %v82 = vld [vmem:[#allocation5 + $0x8] sm:$0xff]
    %v83 = vld [vmem:[#allocation5 + $0x10] sm:$0xff]
    %v84 = vld [vmem:[#allocation5 + $0x18] sm:$0xff]
    %v85 = vld [vmem:[#allocation5 + $0x20] sm:$0xff]
    %v86 = vld [vmem:[#allocation5 + $0x28] sm:$0xff]
    %v87 = vld [vmem:[#allocation5 + $0x30] sm:$0xff]
    %v88 = vld [vmem:[#allocation5 + $0x38] sm:$0xff]
    %v89 = vld [vmem:[#allocation5 + $0x40] sm:$0xff]
    %v90 = vld [vmem:[%s2] sm:$0x7]
    %v92 = vlaneseq
    %v93 = vshrl.u32 %v92, 7
    %v94 = vsub.s32 0, %v93
    %v95 = vrot.slane %v90, %v94
    %v96 = vlaneseq
    %v97 = vshrl.u32 %v96, 7
    %v98 = vsub.s32 1, %v97
    %v99 = vrot.slane %v90, %v98
    %v100 = vlaneseq
    %v101 = vshrl.u32 %v100, 7
    %v102 = vsub.s32 2, %v101
    %v103 = vrot.slane %v90, %v102
    %vm107 = vcmask 195584
    %v109 = vsel %vm107, %v80, 0
    %111 = vmatprep.subr.mxu0 %v82
    %112 = vmatpush1.msra.mxu0 %v81
    %113 = vmatprep.subr.mxu0 %v85
    %114 = vmatpush1.msra.mxu0 %v84
    %115 = vmatprep.subr.mxu0 %v88
    %116 = vmatpush1.msra.mxu0 %v87
    %117 = vmatprep.subr.mxu0 0.0
    %118 = vmatpush1.msra.mxu0 0.0
    %119 = vmatprep.subr.mxu0 0.0
    %120 = vmatpush1.msra.mxu0 0.0
    %121 = vmatprep.subr.mxu0 0.0
    %122 = vmatpush1.msra.mxu0 0.0
    %123 = vmatprep.subr.mxu0 0.0
    %124 = vmatpush1.msra.mxu0 0.0
    %125 = vmatprep.subr.mxu0 0.0
    %126 = vmatpush1.msra.mxu0 0.0
    %127 = vmatprep.subr.mxu0 0.0
    %128 = vmatpush1.msra.mxu0 0.0
    %129 = vmatprep.subr.mxu0 0.0
    %130 = vmatpush1.msra.mxu0 0.0
    %131 = vmatprep.subr.mxu0 0.0
    %132 = vmatpush1.msra.mxu0 0.0
    %133 = vmatprep.subr.mxu0 0.0
    %134 = vmatpush1.msra.mxu0 0.0
    %135 = vmatprep.subr.mxu0 0.0
    %136 = vmatpush1.msra.mxu0 0.0
    %137 = vmatprep.subr.mxu0 0.0
    %138 = vmatpush1.msra.mxu0 0.0
    %139 = vmatprep.subr.mxu0 0.0
    %140 = vmatpush1.msra.mxu0 0.0
    %141 = vmatprep.subr.mxu0 0.0
    %142 = vmatpush1.msra.mxu0 0.0
    %143 = vmatprep.subr.mxu0 0.0
    %144 = vmatpush1.msra.mxu0 0.0
    %145 = vmatprep.subr.mxu0 0.0
    %146 = vmatpush1.msra.mxu0 0.0
    %147 = vmatprep.subr.mxu0 0.0
    %148 = vmatpush1.msra.mxu0 0.0
    %149 = vmatprep.subr.mxu0 0.0
    %150 = vmatpush1.msra.mxu0 0.0
    %151 = vmatprep.subr.mxu0 0.0
    %152 = vmatpush1.msra.mxu0 0.0
    %153 = vmatprep.subr.mxu0 0.0
    %154 = vmatpush1.msra.mxu0 0.0
    %155 = vmatprep.subr.mxu0 0.0
    %156 = vmatpush1.msra.mxu0 0.0
    %157 = vmatprep.subr.mxu0 0.0
    %158 = vmatpush1.msra.mxu0 0.0
    %159 = vmatprep.subr.mxu0 0.0
    %160 = vmatpush1.msra.mxu0 0.0
    %161 = vmatprep.subr.mxu0 0.0
    %162 = vmatpush1.msra.mxu0 0.0
    %163 = vmatprep.subr.mxu0 0.0
    %164 = vmatpush1.msra.mxu0 0.0
    %165 = vmatprep.subr.mxu0 0.0
    %166 = vmatpush1.msra.mxu0 0.0
    %167 = vmatprep.subr.mxu0 0.0
    %168 = vmatpush1.msra.mxu0 0.0
    %169 = vmatprep.subr.mxu0 0.0
    %170 = vmatpush1.msra.mxu0 0.0
    %171 = vmatprep.subr.mxu0 0.0
    %172 = vmatpush1.msra.mxu0 0.0
    %173 = vmatprep.subr.mxu0 0.0
    %174 = vmatpush1.msra.mxu0 0.0
    %175 = vmatprep.mubr.f32.mxu0 0.0
    %176 = vmatmul.mubr.f32.gmra.mrb[0].mxu0 %v109
    %v177 = vpop.f32.mrb[0].mxu0
    %v178 = vadd.f32 %v95, %v177
    %v179 = vpop.f32.mrb[0].mxu0
    %v180 = vadd.f32 %v99, %v179
    %181 = vdwg.mxu0
    %182 = vmatprep.subr.mxu0 0.0
    %183 = vmatpush1.msra.mxu0 %v83
    %184 = vmatprep.subr.mxu0 0.0
    %185 = vmatpush1.msra.mxu0 %v86
    %186 = vmatprep.subr.mxu0 0.0
    %187 = vmatpush1.msra.mxu0 %v89
    %188 = vmatprep.subr.mxu0 0.0
    %189 = vmatpush1.msra.mxu0 0.0
    %190 = vmatprep.subr.mxu0 0.0
    %191 = vmatpush1.msra.mxu0 0.0
    %192 = vmatprep.subr.mxu0 0.0
    %193 = vmatpush1.msra.mxu0 0.0
    %194 = vmatprep.subr.mxu0 0.0
    %195 = vmatpush1.msra.mxu0 0.0
    %196 = vmatprep.subr.mxu0 0.0
    %197 = vmatpush1.msra.mxu0 0.0
    %198 = vmatprep.subr.mxu0 0.0
    %199 = vmatpush1.msra.mxu0 0.0
    %200 = vmatprep.subr.mxu0 0.0
    %201 = vmatpush1.msra.mxu0 0.0
    %202 = vmatprep.subr.mxu0 0.0
    %203 = vmatpush1.msra.mxu0 0.0
    %204 = vmatprep.subr.mxu0 0.0
    %205 = vmatpush1.msra.mxu0 0.0
    %206 = vmatprep.subr.mxu0 0.0
    %207 = vmatpush1.msra.mxu0 0.0
    %208 = vmatprep.subr.mxu0 0.0
    %209 = vmatpush1.msra.mxu0 0.0
    %210 = vmatprep.subr.mxu0 0.0
    %211 = vmatpush1.msra.mxu0 0.0
    %212 = vmatprep.subr.mxu0 0.0
    %213 = vmatpush1.msra.mxu0 0.0
    %214 = vmatprep.subr.mxu0 0.0
    %215 = vmatpush1.msra.mxu0 0.0
    %216 = vmatprep.subr.mxu0 0.0
    %217 = vmatpush1.msra.mxu0 0.0
    %218 = vmatprep.subr.mxu0 0.0
    %219 = vmatpush1.msra.mxu0 0.0
    %220 = vmatprep.subr.mxu0 0.0
    %221 = vmatpush1.msra.mxu0 0.0
    %222 = vmatprep.subr.mxu0 0.0
    %223 = vmatpush1.msra.mxu0 0.0
    %224 = vmatprep.subr.mxu0 0.0
    %225 = vmatpush1.msra.mxu0 0.0
    %226 = vmatprep.subr.mxu0 0.0
    %227 = vmatpush1.msra.mxu0 0.0
    %228 = vmatprep.subr.mxu0 0.0
    %229 = vmatpush1.msra.mxu0 0.0
    %230 = vmatprep.subr.mxu0 0.0
    %231 = vmatpush1.msra.mxu0 0.0
    %232 = vmatprep.subr.mxu0 0.0
    %233 = vmatpush1.msra.mxu0 0.0
    %234 = vmatprep.subr.mxu0 0.0
    %235 = vmatpush1.msra.mxu0 0.0
    %236 = vmatprep.subr.mxu0 0.0
    %237 = vmatpush1.msra.mxu0 0.0
    %238 = vmatprep.subr.mxu0 0.0
    %239 = vmatpush1.msra.mxu0 0.0
    %240 = vmatprep.subr.mxu0 0.0
    %241 = vmatpush1.msra.mxu0 0.0
    %242 = vmatprep.subr.mxu0 0.0
    %243 = vmatpush1.msra.mxu0 0.0
    %244 = vmatprep.subr.mxu0 0.0
    %245 = vmatpush1.msra.mxu0 0.0
    %246 = vmatprep.mubr.f32.mxu0 0.0
    %247 = vmatmul.mubr.f32.gmra.mrb[0].mxu0 %v109
    %v248 = vpop.f32.mrb[0].mxu0
    %v249 = vadd.f32 %v103, %v248
    %v250 = vpop.f32.mrb[0].mxu0
    %251 = vdwg.mxu0
    %v252 = vmul.f32 %v178, 0.1
    %v253 = vmul.f32 %v180, 0.1
    %v254 = vmul.f32 %v249, 0.1
    %v255 = vmax.f32 %v178, %v252
    %v256 = vmax.f32 %v180, %v253
    %v257 = vmax.f32 %v249, %v254
    %v258 = vld [vmem:[#allocation7] sm:$0xff]
    %v259 = vld [vmem:[#allocation7 + $0x8] sm:$0xff]
    %v260 = vld [vmem:[#allocation7 + $0x10] sm:$0xff]
    %v261 = vld [vmem:[#allocation7 + $0x18] sm:$0xff]
    %v262 = vld [vmem:[#allocation7 + $0x20] sm:$0xff]
    %v263 = vld [vmem:[#allocation7 + $0x28] sm:$0xff]
    %v264 = vld [vmem:[#allocation7 + $0x30] sm:$0xff]
    %v265 = vld [vmem:[#allocation7 + $0x38] sm:$0xff]
    %v266 = vld [vmem:[#allocation7 + $0x40] sm:$0xff]
    %v267 = vld [vmem:[#allocation7 + $0x48] sm:$0xff]
    %v268 = vld [vmem:[#allocation7 + $0x50] sm:$0xff]
    %v269 = vld [vmem:[#allocation7 + $0x58] sm:$0xff]
    %v270 = vld [vmem:[#allocation7 + $0x60] sm:$0xff]
    %v271 = vld [vmem:[#allocation7 + $0x68] sm:$0xff]
    %v272 = vld [vmem:[#allocation7 + $0x70] sm:$0xff]
    %v273 = vld [vmem:[#allocation7 + $0x78] sm:$0xff]
    %v274 = vld [vmem:[%s4] sm:$0x1]
    %v276 = vlaneseq
    %v277 = vshrl.u32 %v276, 7
    %v278 = vsub.s32 0, %v277
    %v279 = vrot.slane %v274, %v278
    %281 = vmatprep.subr.mxu0 0.0
    %282 = vmatpush1.msra.mxu0 %v258
    %283 = vmatprep.subr.mxu0 0.0
    %284 = vmatpush1.msra.mxu0 %v259
    %285 = vmatprep.subr.mxu0 0.0
    %286 = vmatpush1.msra.mxu0 %v260
    %287 = vmatprep.subr.mxu0 0.0
    %288 = vmatpush1.msra.mxu0 %v261
    %289 = vmatprep.subr.mxu0 0.0
    %290 = vmatpush1.msra.mxu0 %v262
    %291 = vmatprep.subr.mxu0 0.0
    %292 = vmatpush1.msra.mxu0 %v263
    %293 = vmatprep.subr.mxu0 0.0
    %294 = vmatpush1.msra.mxu0 %v264
    %295 = vmatprep.subr.mxu0 0.0
    %296 = vmatpush1.msra.mxu0 %v265
    %297 = vmatprep.subr.mxu0 0.0
    %298 = vmatpush1.msra.mxu0 %v266
    %299 = vmatprep.subr.mxu0 0.0
    %300 = vmatpush1.msra.mxu0 %v267
    %301 = vmatprep.subr.mxu0 0.0
    %302 = vmatpush1.msra.mxu0 %v268
    %303 = vmatprep.subr.mxu0 0.0
    %304 = vmatpush1.msra.mxu0 %v269
    %305 = vmatprep.subr.mxu0 0.0
    %306 = vmatpush1.msra.mxu0 %v270
    %307 = vmatprep.subr.mxu0 0.0
    %308 = vmatpush1.msra.mxu0 %v271
    %309 = vmatprep.subr.mxu0 0.0
    %310 = vmatpush1.msra.mxu0 %v272
    %311 = vmatprep.subr.mxu0 0.0
    %312 = vmatpush1.msra.mxu0 %v273
    %313 = vmatprep.subr.mxu0 0.0
    %314 = vmatpush1.msra.mxu0 0.0
    %315 = vmatprep.subr.mxu0 0.0
    %316 = vmatpush1.msra.mxu0 0.0
    %317 = vmatprep.subr.mxu0 0.0
    %318 = vmatpush1.msra.mxu0 0.0
    %319 = vmatprep.subr.mxu0 0.0
    %320 = vmatpush1.msra.mxu0 0.0
    %321 = vmatprep.subr.mxu0 0.0
    %322 = vmatpush1.msra.mxu0 0.0
    %323 = vmatprep.subr.mxu0 0.0
    %324 = vmatpush1.msra.mxu0 0.0
    %325 = vmatprep.subr.mxu0 0.0
    %326 = vmatpush1.msra.mxu0 0.0
    %327 = vmatprep.subr.mxu0 0.0
    %328 = vmatpush1.msra.mxu0 0.0
    %329 = vmatprep.subr.mxu0 0.0
    %330 = vmatpush1.msra.mxu0 0.0
    %331 = vmatprep.subr.mxu0 0.0
    %332 = vmatpush1.msra.mxu0 0.0
    %333 = vmatprep.subr.mxu0 0.0
    %334 = vmatpush1.msra.mxu0 0.0
    %335 = vmatprep.subr.mxu0 0.0
    %336 = vmatpush1.msra.mxu0 0.0
    %337 = vmatprep.subr.mxu0 0.0
    %338 = vmatpush1.msra.mxu0 0.0
    %339 = vmatprep.subr.mxu0 0.0
    %340 = vmatpush1.msra.mxu0 0.0
    %341 = vmatprep.subr.mxu0 0.0
    %342 = vmatpush1.msra.mxu0 0.0
    %343 = vmatprep.subr.mxu0 0.0
    %344 = vmatpush1.msra.mxu0 0.0
    %345 = vmatprep.mubr.f32.mxu0 0.0
    %346 = vmatmul.mubr.f32.gmra.mrb[0].mxu0 %v255
    %v347 = vpop.f32.mrb[0].mxu0
    %v348 = vadd.f32 %v279, %v347
    %v349 = vpop.f32.mrb[0].mxu0
    %350 = vdwg.mxu0
    %v351 = vmul.f32 %v348, 0.1
    %v352 = vmax.f32 %v348, %v351
    %v353 = vld [vmem:[#allocation8] sm:$0xff]
    %v354 = vld [vmem:[#allocation8 + $0x8] sm:$0xff]
    %v355 = vld [vmem:[#allocation8 + $0x10] sm:$0xff]
    %v356 = vld [vmem:[#allocation8 + $0x18] sm:$0xff]
    %v357 = vld [vmem:[#allocation8 + $0x20] sm:$0xff]
    %v358 = vld [vmem:[#allocation8 + $0x28] sm:$0xff]
    %v359 = vld [vmem:[#allocation8 + $0x30] sm:$0xff]
    %v360 = vld [vmem:[#allocation8 + $0x38] sm:$0xff]
    %v361 = vld [vmem:[#allocation8 + $0x40] sm:$0xff]
    %v362 = vld [vmem:[#allocation8 + $0x48] sm:$0xff]
    %v363 = vld [vmem:[#allocation8 + $0x50] sm:$0xff]
    %v364 = vld [vmem:[#allocation8 + $0x58] sm:$0xff]
    %v365 = vld [vmem:[#allocation8 + $0x60] sm:$0xff]
    %v366 = vld [vmem:[#allocation8 + $0x68] sm:$0xff]
    %v367 = vld [vmem:[#allocation8 + $0x70] sm:$0xff]
    %v368 = vld [vmem:[#allocation8 + $0x78] sm:$0xff]
    %v369 = vld [vmem:[%s6] sm:$0x1]
    %v371 = vlaneseq
    %v372 = vshrl.u32 %v371, 7
    %v373 = vsub.s32 0, %v372
    %v374 = vrot.slane %v369, %v373
    %376 = vmatprep.subr.mxu0 0.0
    %377 = vmatpush1.msra.mxu0 %v353
    %378 = vmatprep.subr.mxu0 0.0
    %379 = vmatpush1.msra.mxu0 %v354
    %380 = vmatprep.subr.mxu0 0.0
    %381 = vmatpush1.msra.mxu0 %v355
    %382 = vmatprep.subr.mxu0 0.0
    %383 = vmatpush1.msra.mxu0 %v356
    %384 = vmatprep.subr.mxu0 0.0
    %385 = vmatpush1.msra.mxu0 %v357
    %386 = vmatprep.subr.mxu0 0.0
    %387 = vmatpush1.msra.mxu0 %v358
    %388 = vmatprep.subr.mxu0 0.0
    %389 = vmatpush1.msra.mxu0 %v359
    %390 = vmatprep.subr.mxu0 0.0
    %391 = vmatpush1.msra.mxu0 %v360
    %392 = vmatprep.subr.mxu0 0.0
    %393 = vmatpush1.msra.mxu0 %v361
    %394 = vmatprep.subr.mxu0 0.0
    %395 = vmatpush1.msra.mxu0 %v362
    %396 = vmatprep.subr.mxu0 0.0
    %397 = vmatpush1.msra.mxu0 %v363
    %398 = vmatprep.subr.mxu0 0.0
    %399 = vmatpush1.msra.mxu0 %v364
    %400 = vmatprep.subr.mxu0 0.0
    %401 = vmatpush1.msra.mxu0 %v365
    %402 = vmatprep.subr.mxu0 0.0
    %403 = vmatpush1.msra.mxu0 %v366
    %404 = vmatprep.subr.mxu0 0.0
    %405 = vmatpush1.msra.mxu0 %v367
    %406 = vmatprep.subr.mxu0 0.0
    %407 = vmatpush1.msra.mxu0 %v368
    %408 = vmatprep.subr.mxu0 0.0
    %409 = vmatpush1.msra.mxu0 0.0
    %410 = vmatprep.subr.mxu0 0.0
    %411 = vmatpush1.msra.mxu0 0.0
    %412 = vmatprep.subr.mxu0 0.0
    %413 = vmatpush1.msra.mxu0 0.0
    %414 = vmatprep.subr.mxu0 0.0
    %415 = vmatpush1.msra.mxu0 0.0
    %416 = vmatprep.subr.mxu0 0.0
    %417 = vmatpush1.msra.mxu0 0.0
    %418 = vmatprep.subr.mxu0 0.0
    %419 = vmatpush1.msra.mxu0 0.0
    %420 = vmatprep.subr.mxu0 0.0
    %421 = vmatpush1.msra.mxu0 0.0
    %422 = vmatprep.subr.mxu0 0.0
    %423 = vmatpush1.msra.mxu0 0.0
    %424 = vmatprep.subr.mxu0 0.0
    %425 = vmatpush1.msra.mxu0 0.0
    %426 = vmatprep.subr.mxu0 0.0
    %427 = vmatpush1.msra.mxu0 0.0
    %428 = vmatprep.subr.mxu0 0.0
    %429 = vmatpush1.msra.mxu0 0.0
    %430 = vmatprep.subr.mxu0 0.0
    %431 = vmatpush1.msra.mxu0 0.0
    %432 = vmatprep.subr.mxu0 0.0
    %433 = vmatpush1.msra.mxu0 0.0
    %434 = vmatprep.subr.mxu0 0.0
    %435 = vmatpush1.msra.mxu0 0.0
    %436 = vmatprep.subr.mxu0 0.0
    %437 = vmatpush1.msra.mxu0 0.0
    %438 = vmatprep.subr.mxu0 0.0
    %439 = vmatpush1.msra.mxu0 0.0
    %440 = vmatprep.mubr.f32.mxu0 0.0
    %441 = vmatmul.mubr.f32.gmra.mrb[0].mxu0 %v352
    %v442 = vpop.f32.mrb[0].mxu0
    %v443 = vadd.f32 %v374, %v442
    %v444 = vpop.f32.mrb[0].mxu0
    %445 = vdwg.mxu0
    %446 = vst [vmem:[#allocation10] sm:$0xff] %v443
    %s447 = scalar_lea.vmem [#allocation7], 128
    %v448 = vld [vmem:[%s447] sm:$0xff]
    %v449 = vld [vmem:[%s447 + $0x8] sm:$0xff]
    %v450 = vld [vmem:[%s447 + $0x10] sm:$0xff]
    %v451 = vld [vmem:[%s447 + $0x18] sm:$0xff]
    %v452 = vld [vmem:[%s447 + $0x20] sm:$0xff]
    %v453 = vld [vmem:[%s447 + $0x28] sm:$0xff]
    %v454 = vld [vmem:[%s447 + $0x30] sm:$0xff]
    %v455 = vld [vmem:[%s447 + $0x38] sm:$0xff]
    %v456 = vld [vmem:[%s447 + $0x40] sm:$0xff]
    %v457 = vld [vmem:[%s447 + $0x48] sm:$0xff]
    %v458 = vld [vmem:[%s447 + $0x50] sm:$0xff]
    %v459 = vld [vmem:[%s447 + $0x58] sm:$0xff]
    %v460 = vld [vmem:[%s447 + $0x60] sm:$0xff]
    %v461 = vld [vmem:[%s447 + $0x68] sm:$0xff]
    %v462 = vld [vmem:[%s447 + $0x70] sm:$0xff]
    %v463 = vld [vmem:[%s447 + $0x78] sm:$0xff]
    %s464 = scalar_lea.vmem %s4, 1
    %v465 = vld [vmem:[%s464] sm:$0x1]
    %v467 = vlaneseq
    %v468 = vshrl.u32 %v467, 7
    %v469 = vsub.s32 0, %v468
    %v470 = vrot.slane %v465, %v469
    %472 = vmatprep.subr.mxu0 0.0
    %473 = vmatpush1.msra.mxu0 %v448
    %474 = vmatprep.subr.mxu0 0.0
    %475 = vmatpush1.msra.mxu0 %v449
    %476 = vmatprep.subr.mxu0 0.0
    %477 = vmatpush1.msra.mxu0 %v450
    %478 = vmatprep.subr.mxu0 0.0
    %479 = vmatpush1.msra.mxu0 %v451
    %480 = vmatprep.subr.mxu0 0.0
    %481 = vmatpush1.msra.mxu0 %v452
    %482 = vmatprep.subr.mxu0 0.0
    %483 = vmatpush1.msra.mxu0 %v453
    %484 = vmatprep.subr.mxu0 0.0
    %485 = vmatpush1.msra.mxu0 %v454
    %486 = vmatprep.subr.mxu0 0.0
    %487 = vmatpush1.msra.mxu0 %v455
    %488 = vmatprep.subr.mxu0 0.0
    %489 = vmatpush1.msra.mxu0 %v456
    %490 = vmatprep.subr.mxu0 0.0
    %491 = vmatpush1.msra.mxu0 %v457
    %492 = vmatprep.subr.mxu0 0.0
    %493 = vmatpush1.msra.mxu0 %v458
    %494 = vmatprep.subr.mxu0 0.0
    %495 = vmatpush1.msra.mxu0 %v459
    %496 = vmatprep.subr.mxu0 0.0
    %497 = vmatpush1.msra.mxu0 %v460
    %498 = vmatprep.subr.mxu0 0.0
    %499 = vmatpush1.msra.mxu0 %v461
    %500 = vmatprep.subr.mxu0 0.0
    %501 = vmatpush1.msra.mxu0 %v462
    %502 = vmatprep.subr.mxu0 0.0
    %503 = vmatpush1.msra.mxu0 %v463
    %504 = vmatprep.subr.mxu0 0.0
    %505 = vmatpush1.msra.mxu0 0.0
    %506 = vmatprep.subr.mxu0 0.0
    %507 = vmatpush1.msra.mxu0 0.0
    %508 = vmatprep.subr.mxu0 0.0
    %509 = vmatpush1.msra.mxu0 0.0
    %510 = vmatprep.subr.mxu0 0.0
    %511 = vmatpush1.msra.mxu0 0.0
    %512 = vmatprep.subr.mxu0 0.0
    %513 = vmatpush1.msra.mxu0 0.0
    %514 = vmatprep.subr.mxu0 0.0
    %515 = vmatpush1.msra.mxu0 0.0
    %516 = vmatprep.subr.mxu0 0.0
    %517 = vmatpush1.msra.mxu0 0.0
    %518 = vmatprep.subr.mxu0 0.0
    %519 = vmatpush1.msra.mxu0 0.0
    %520 = vmatprep.subr.mxu0 0.0
    %521 = vmatpush1.msra.mxu0 0.0
    %522 = vmatprep.subr.mxu0 0.0
    %523 = vmatpush1.msra.mxu0 0.0
    %524 = vmatprep.subr.mxu0 0.0
    %525 = vmatpush1.msra.mxu0 0.0
    %526 = vmatprep.subr.mxu0 0.0
    %527 = vmatpush1.msra.mxu0 0.0
    %528 = vmatprep.subr.mxu0 0.0
    %529 = vmatpush1.msra.mxu0 0.0
    %530 = vmatprep.subr.mxu0 0.0
    %531 = vmatpush1.msra.mxu0 0.0
    %532 = vmatprep.subr.mxu0 0.0
    %533 = vmatpush1.msra.mxu0 0.0
    %534 = vmatprep.subr.mxu0 0.0
    %535 = vmatpush1.msra.mxu0 0.0
    %536 = vmatprep.mubr.f32.mxu0 0.0
    %537 = vmatmul.mubr.f32.gmra.mrb[0].mxu0 %v256
    %v538 = vpop.f32.mrb[0].mxu0
    %v539 = vadd.f32 %v470, %v538
    %v540 = vpop.f32.mrb[0].mxu0
    %541 = vdwg.mxu0
    %v542 = vmul.f32 %v539, 0.1
    %v543 = vmax.f32 %v539, %v542
    %s544 = scalar_lea.vmem [#allocation8], 128
    %v545 = vld [vmem:[%s544] sm:$0xff]
    %v546 = vld [vmem:[%s544 + $0x8] sm:$0xff]
    %v547 = vld [vmem:[%s544 + $0x10] sm:$0xff]
    %v548 = vld [vmem:[%s544 + $0x18] sm:$0xff]
    %v549 = vld [vmem:[%s544 + $0x20] sm:$0xff]
    %v550 = vld [vmem:[%s544 + $0x28] sm:$0xff]
    %v551 = vld [vmem:[%s544 + $0x30] sm:$0xff]
    %v552 = vld [vmem:[%s544 + $0x38] sm:$0xff]
    %v553 = vld [vmem:[%s544 + $0x40] sm:$0xff]
    %v554 = vld [vmem:[%s544 + $0x48] sm:$0xff]
    %v555 = vld [vmem:[%s544 + $0x50] sm:$0xff]
    %v556 = vld [vmem:[%s544 + $0x58] sm:$0xff]
    %v557 = vld [vmem:[%s544 + $0x60] sm:$0xff]
    %v558 = vld [vmem:[%s544 + $0x68] sm:$0xff]
    %v559 = vld [vmem:[%s544 + $0x70] sm:$0xff]
    %v560 = vld [vmem:[%s544 + $0x78] sm:$0xff]
    %s561 = scalar_lea.vmem %s6, 1
    %v562 = vld [vmem:[%s561] sm:$0x1]
    %v564 = vlaneseq
    %v565 = vshrl.u32 %v564, 7
    %v566 = vsub.s32 0, %v565
    %v567 = vrot.slane %v562, %v566
    %569 = vmatprep.subr.mxu0 0.0
    %570 = vmatpush1.msra.mxu0 %v545
    %571 = vmatprep.subr.mxu0 0.0
    %572 = vmatpush1.msra.mxu0 %v546
    %573 = vmatprep.subr.mxu0 0.0
    %574 = vmatpush1.msra.mxu0 %v547
    %575 = vmatprep.subr.mxu0 0.0
    %576 = vmatpush1.msra.mxu0 %v548
    %577 = vmatprep.subr.mxu0 0.0
    %578 = vmatpush1.msra.mxu0 %v549
    %579 = vmatprep.subr.mxu0 0.0
    %580 = vmatpush1.msra.mxu0 %v550
    %581 = vmatprep.subr.mxu0 0.0
    %582 = vmatpush1.msra.mxu0 %v551
    %583 = vmatprep.subr.mxu0 0.0
    %584 = vmatpush1.msra.mxu0 %v552
    %585 = vmatprep.subr.mxu0 0.0
    %586 = vmatpush1.msra.mxu0 %v553
    %587 = vmatprep.subr.mxu0 0.0
    %588 = vmatpush1.msra.mxu0 %v554
    %589 = vmatprep.subr.mxu0 0.0
    %590 = vmatpush1.msra.mxu0 %v555
    %591 = vmatprep.subr.mxu0 0.0
    %592 = vmatpush1.msra.mxu0 %v556
    %593 = vmatprep.subr.mxu0 0.0
    %594 = vmatpush1.msra.mxu0 %v557
    %595 = vmatprep.subr.mxu0 0.0
    %596 = vmatpush1.msra.mxu0 %v558
    %597 = vmatprep.subr.mxu0 0.0
    %598 = vmatpush1.msra.mxu0 %v559
    %599 = vmatprep.subr.mxu0 0.0
    %600 = vmatpush1.msra.mxu0 %v560
    %601 = vmatprep.subr.mxu0 0.0
    %602 = vmatpush1.msra.mxu0 0.0
    %603 = vmatprep.subr.mxu0 0.0
    %604 = vmatpush1.msra.mxu0 0.0
    %605 = vmatprep.subr.mxu0 0.0
    %606 = vmatpush1.msra.mxu0 0.0
    %607 = vmatprep.subr.mxu0 0.0
    %608 = vmatpush1.msra.mxu0 0.0
    %609 = vmatprep.subr.mxu0 0.0
    %610 = vmatpush1.msra.mxu0 0.0
    %611 = vmatprep.subr.mxu0 0.0
    %612 = vmatpush1.msra.mxu0 0.0
    %613 = vmatprep.subr.mxu0 0.0
    %614 = vmatpush1.msra.mxu0 0.0
    %615 = vmatprep.subr.mxu0 0.0
    %616 = vmatpush1.msra.mxu0 0.0
    %617 = vmatprep.subr.mxu0 0.0
    %618 = vmatpush1.msra.mxu0 0.0
    %619 = vmatprep.subr.mxu0 0.0
    %620 = vmatpush1.msra.mxu0 0.0
    %621 = vmatprep.subr.mxu0 0.0
    %622 = vmatpush1.msra.mxu0 0.0
    %623 = vmatprep.subr.mxu0 0.0
    %624 = vmatpush1.msra.mxu0 0.0
    %625 = vmatprep.subr.mxu0 0.0
    %626 = vmatpush1.msra.mxu0 0.0
    %627 = vmatprep.subr.mxu0 0.0
    %628 = vmatpush1.msra.mxu0 0.0
    %629 = vmatprep.subr.mxu0 0.0
    %630 = vmatpush1.msra.mxu0 0.0
    %631 = vmatprep.subr.mxu0 0.0
    %632 = vmatpush1.msra.mxu0 0.0
    %633 = vmatprep.mubr.f32.mxu0 0.0
    %634 = vmatmul.mubr.f32.gmra.mrb[0].mxu0 %v543
    %v635 = vpop.f32.mrb[0].mxu0
    %v636 = vadd.f32 %v567, %v635
    %v637 = vpop.f32.mrb[0].mxu0
    %638 = vdwg.mxu0
    %639 = vst [vmem:[#allocation10 + $0x8] sm:$0xff] %v636
    %s640 = scalar_lea.vmem [#allocation7], 256
    %v641 = vld [vmem:[%s640] sm:$0xff]
    %v642 = vld [vmem:[%s640 + $0x8] sm:$0xff]
    %v643 = vld [vmem:[%s640 + $0x10] sm:$0xff]
    %v644 = vld [vmem:[%s640 + $0x18] sm:$0xff]
    %v645 = vld [vmem:[%s640 + $0x20] sm:$0xff]
    %v646 = vld [vmem:[%s640 + $0x28] sm:$0xff]
    %v647 = vld [vmem:[%s640 + $0x30] sm:$0xff]
    %v648 = vld [vmem:[%s640 + $0x38] sm:$0xff]
    %v649 = vld [vmem:[%s640 + $0x40] sm:$0xff]
    %v650 = vld [vmem:[%s640 + $0x48] sm:$0xff]
    %v651 = vld [vmem:[%s640 + $0x50] sm:$0xff]
    %v652 = vld [vmem:[%s640 + $0x58] sm:$0xff]
    %v653 = vld [vmem:[%s640 + $0x60] sm:$0xff]
    %v654 = vld [vmem:[%s640 + $0x68] sm:$0xff]
    %v655 = vld [vmem:[%s640 + $0x70] sm:$0xff]
    %v656 = vld [vmem:[%s640 + $0x78] sm:$0xff]
    %s657 = scalar_lea.vmem %s4, 2
    %v658 = vld [vmem:[%s657] sm:$0x1]
    %v660 = vlaneseq
    %v661 = vshrl.u32 %v660, 7
    %v662 = vsub.s32 0, %v661
    %v663 = vrot.slane %v658, %v662
    %665 = vmatprep.subr.mxu0 0.0
    %666 = vmatpush1.msra.mxu0 %v641
    %667 = vmatprep.subr.mxu0 0.0
    %668 = vmatpush1.msra.mxu0 %v642
    %669 = vmatprep.subr.mxu0 0.0
    %670 = vmatpush1.msra.mxu0 %v643
    %671 = vmatprep.subr.mxu0 0.0
    %672 = vmatpush1.msra.mxu0 %v644
    %673 = vmatprep.subr.mxu0 0.0
    %674 = vmatpush1.msra.mxu0 %v645
    %675 = vmatprep.subr.mxu0 0.0
    %676 = vmatpush1.msra.mxu0 %v646
    %677 = vmatprep.subr.mxu0 0.0
    %678 = vmatpush1.msra.mxu0 %v647
    %679 = vmatprep.subr.mxu0 0.0
    %680 = vmatpush1.msra.mxu0 %v648
    %681 = vmatprep.subr.mxu0 0.0
    %682 = vmatpush1.msra.mxu0 %v649
    %683 = vmatprep.subr.mxu0 0.0
    %684 = vmatpush1.msra.mxu0 %v650
    %685 = vmatprep.subr.mxu0 0.0
    %686 = vmatpush1.msra.mxu0 %v651
    %687 = vmatprep.subr.mxu0 0.0
    %688 = vmatpush1.msra.mxu0 %v652
    %689 = vmatprep.subr.mxu0 0.0
    %690 = vmatpush1.msra.mxu0 %v653
    %691 = vmatprep.subr.mxu0 0.0
    %692 = vmatpush1.msra.mxu0 %v654
    %693 = vmatprep.subr.mxu0 0.0
    %694 = vmatpush1.msra.mxu0 %v655
    %695 = vmatprep.subr.mxu0 0.0
    %696 = vmatpush1.msra.mxu0 %v656
    %697 = vmatprep.subr.mxu0 0.0
    %698 = vmatpush1.msra.mxu0 0.0
    %699 = vmatprep.subr.mxu0 0.0
    %700 = vmatpush1.msra.mxu0 0.0
    %701 = vmatprep.subr.mxu0 0.0
    %702 = vmatpush1.msra.mxu0 0.0
    %703 = vmatprep.subr.mxu0 0.0
    %704 = vmatpush1.msra.mxu0 0.0
    %705 = vmatprep.subr.mxu0 0.0
    %706 = vmatpush1.msra.mxu0 0.0
    %707 = vmatprep.subr.mxu0 0.0
    %708 = vmatpush1.msra.mxu0 0.0
    %709 = vmatprep.subr.mxu0 0.0
    %710 = vmatpush1.msra.mxu0 0.0
    %711 = vmatprep.subr.mxu0 0.0
    %712 = vmatpush1.msra.mxu0 0.0
    %713 = vmatprep.subr.mxu0 0.0
    %714 = vmatpush1.msra.mxu0 0.0
    %715 = vmatprep.subr.mxu0 0.0
    %716 = vmatpush1.msra.mxu0 0.0
    %717 = vmatprep.subr.mxu0 0.0
    %718 = vmatpush1.msra.mxu0 0.0
    %719 = vmatprep.subr.mxu0 0.0
    %720 = vmatpush1.msra.mxu0 0.0
    %721 = vmatprep.subr.mxu0 0.0
    %722 = vmatpush1.msra.mxu0 0.0
    %723 = vmatprep.subr.mxu0 0.0
    %724 = vmatpush1.msra.mxu0 0.0
    %725 = vmatprep.subr.mxu0 0.0
    %726 = vmatpush1.msra.mxu0 0.0
    %727 = vmatprep.subr.mxu0 0.0
    %728 = vmatpush1.msra.mxu0 0.0
    %729 = vmatprep.mubr.f32.mxu0 0.0
    %730 = vmatmul.mubr.f32.gmra.mrb[0].mxu0 %v257
    %v731 = vpop.f32.mrb[0].mxu0
    %v732 = vadd.f32 %v663, %v731
    %v733 = vpop.f32.mrb[0].mxu0
    %734 = vdwg.mxu0
    %v735 = vmul.f32 %v732, 0.1
    %v736 = vmax.f32 %v732, %v735
    %s737 = scalar_lea.vmem [#allocation8], 256
    %v738 = vld [vmem:[%s737] sm:$0xff]
    %v739 = vld [vmem:[%s737 + $0x8] sm:$0xff]
    %v740 = vld [vmem:[%s737 + $0x10] sm:$0xff]
    %v741 = vld [vmem:[%s737 + $0x18] sm:$0xff]
    %v742 = vld [vmem:[%s737 + $0x20] sm:$0xff]
    %v743 = vld [vmem:[%s737 + $0x28] sm:$0xff]
    %v744 = vld [vmem:[%s737 + $0x30] sm:$0xff]
    %v745 = vld [vmem:[%s737 + $0x38] sm:$0xff]
    %v746 = vld [vmem:[%s737 + $0x40] sm:$0xff]
    %v747 = vld [vmem:[%s737 + $0x48] sm:$0xff]
    %v748 = vld [vmem:[%s737 + $0x50] sm:$0xff]
    %v749 = vld [vmem:[%s737 + $0x58] sm:$0xff]
    %v750 = vld [vmem:[%s737 + $0x60] sm:$0xff]
    %v751 = vld [vmem:[%s737 + $0x68] sm:$0xff]
    %v752 = vld [vmem:[%s737 + $0x70] sm:$0xff]
    %v753 = vld [vmem:[%s737 + $0x78] sm:$0xff]
    %s754 = scalar_lea.vmem %s6, 2
    %v755 = vld [vmem:[%s754] sm:$0x1]
    %v757 = vlaneseq
    %v758 = vshrl.u32 %v757, 7
    %v759 = vsub.s32 0, %v758
    %v760 = vrot.slane %v755, %v759
    %762 = vmatprep.subr.mxu0 0.0
    %763 = vmatpush1.msra.mxu0 %v738
    %764 = vmatprep.subr.mxu0 0.0
    %765 = vmatpush1.msra.mxu0 %v739
    %766 = vmatprep.subr.mxu0 0.0
    %767 = vmatpush1.msra.mxu0 %v740
    %768 = vmatprep.subr.mxu0 0.0
    %769 = vmatpush1.msra.mxu0 %v741
    %770 = vmatprep.subr.mxu0 0.0
    %771 = vmatpush1.msra.mxu0 %v742
    %772 = vmatprep.subr.mxu0 0.0
    %773 = vmatpush1.msra.mxu0 %v743
    %774 = vmatprep.subr.mxu0 0.0
    %775 = vmatpush1.msra.mxu0 %v744
    %776 = vmatprep.subr.mxu0 0.0
    %777 = vmatpush1.msra.mxu0 %v745
    %778 = vmatprep.subr.mxu0 0.0
    %779 = vmatpush1.msra.mxu0 %v746
    %780 = vmatprep.subr.mxu0 0.0
    %781 = vmatpush1.msra.mxu0 %v747
    %782 = vmatprep.subr.mxu0 0.0
    %783 = vmatpush1.msra.mxu0 %v748
    %784 = vmatprep.subr.mxu0 0.0
    %785 = vmatpush1.msra.mxu0 %v749
    %786 = vmatprep.subr.mxu0 0.0
    %787 = vmatpush1.msra.mxu0 %v750
    %788 = vmatprep.subr.mxu0 0.0
    %789 = vmatpush1.msra.mxu0 %v751
    %790 = vmatprep.subr.mxu0 0.0
    %791 = vmatpush1.msra.mxu0 %v752
    %792 = vmatprep.subr.mxu0 0.0
    %793 = vmatpush1.msra.mxu0 %v753
    %794 = vmatprep.subr.mxu0 0.0
    %795 = vmatpush1.msra.mxu0 0.0
    %796 = vmatprep.subr.mxu0 0.0
    %797 = vmatpush1.msra.mxu0 0.0
    %798 = vmatprep.subr.mxu0 0.0
    %799 = vmatpush1.msra.mxu0 0.0
    %800 = vmatprep.subr.mxu0 0.0
    %801 = vmatpush1.msra.mxu0 0.0
    %802 = vmatprep.subr.mxu0 0.0
    %803 = vmatpush1.msra.mxu0 0.0
    %804 = vmatprep.subr.mxu0 0.0
    %805 = vmatpush1.msra.mxu0 0.0
    %806 = vmatprep.subr.mxu0 0.0
    %807 = vmatpush1.msra.mxu0 0.0
    %808 = vmatprep.subr.mxu0 0.0
    %809 = vmatpush1.msra.mxu0 0.0
    %810 = vmatprep.subr.mxu0 0.0
    %811 = vmatpush1.msra.mxu0 0.0
    %812 = vmatprep.subr.mxu0 0.0
    %813 = vmatpush1.msra.mxu0 0.0
    %814 = vmatprep.subr.mxu0 0.0
    %815 = vmatpush1.msra.mxu0 0.0
    %816 = vmatprep.subr.mxu0 0.0
    %817 = vmatpush1.msra.mxu0 0.0
    %818 = vmatprep.subr.mxu0 0.0
    %819 = vmatpush1.msra.mxu0 0.0
    %820 = vmatprep.subr.mxu0 0.0
    %821 = vmatpush1.msra.mxu0 0.0
    %822 = vmatprep.subr.mxu0 0.0
    %823 = vmatpush1.msra.mxu0 0.0
    %824 = vmatprep.subr.mxu0 0.0
    %825 = vmatpush1.msra.mxu0 0.0
    %826 = vmatprep.mubr.f32.mxu0 0.0
    %827 = vmatmul.mubr.f32.gmra.mrb[0].mxu0 %v736
    %v828 = vpop.f32.mrb[0].mxu0
    %v829 = vadd.f32 %v760, %v828
    %v830 = vpop.f32.mrb[0].mxu0
    %831 = vdwg.mxu0
    %832 = vst [vmem:[#allocation10 + $0x10] sm:$0xff] %v829
    // Predicated region
    $region46: #{tpu_custom_call.1} parent=1 // pred_check
      _
    $region47: #{tpu_custom_call.1} parent=1 // pred_check_branch
      %834 = sbr.rel (0) target = $region49
    $region48: #{tpu_custom_call.1} parent=1 // pred_region
      %s836 = ssub.s32 384, 384
      %837 = vsyncadd [#allocation4], %s836
      %s839 = sshll.u32 [#allocation10], 4
      %s840 = int_to_ptr.vmem [resolvable:$true] %s839
      %842 = dma.vmem_to_hbm [thread:$0]  %s840, 384, %s7, [#allocation4]
    $region49: #{tpu_custom_call.1} parent=1 // pred_fallthru
      _
    // Predicated region
    $region50: #{tpu_custom_call.1} parent=1 // pred_check
      _
    $region51: #{tpu_custom_call.1} parent=1 // pred_check_branch
      %844 = sbr.rel (0) target = $region53
    $region52: #{tpu_custom_call.1} parent=1 // pred_region
      %845 = dma.done [#allocation4], 384
    $region53: #{tpu_custom_call.1} parent=1 // pred_fallthru
      _
    %846 = vsyncpa [#allocation3], 1
    %847 = vsyncpa [#allocation6], 1
    %848 = vsyncpa [#allocation9], 1
    %849 = vsyncpa [#allocation4], 1

</llo_original>
